<compile_context>
chip_gen: v6e
topology: v6e:2x2x1
jax: 0.10.0
libtpu: 0.0.40
codegen_flags: <defaults>
</compile_context>

<pallas_src>
import math
import functools

import jax
import jax.numpy as jnp
import numpy as np
from jax import lax
from jax.experimental import pallas as pl
from jax.experimental.pallas import tpu as pltpu

LN_EPS = 1e-5
INV_SQRT2 = 0.7071067811865476
NEG_INF = -1e30


def _layer_norm(v, w, b):
    mu = jnp.mean(v, axis=-1, keepdims=True)
    var = jnp.mean((v - mu) ** 2, axis=-1, keepdims=True)
    return (v - mu) * lax.rsqrt(var + LN_EPS) * w + b


def _gelu_exact(v):
    # nn.GELU() default = exact erf-based GELU
    return 0.5 * v * (1.0 + lax.erf(v * INV_SQRT2))


def gpt_block_kernel(n_head, q_tile, mlp_chunk,
                     x_ref,
                     ln1w_ref, ln1b_ref,
                     wqkvT_ref, bqkvT_ref,
                     woR_ref, bo_ref,
                     ln2w_ref, ln2b_ref,
                     wfc_ref, bfc_ref, wpr_ref, bpr_ref,
                     out_ref,
                     x2_s):
    _, T, C = x_ref.shape
    H = n_head
    Dh = C // H
    bf16 = jnp.bfloat16

    # ------------- attention phase (scratch scoped => freed before MLP) -----
    def attention_phase(q_s, k_s, v_s):
        x = x_ref[0]                                          # (T, C) f32
        h1 = _layer_norm(x, ln1w_ref[...], ln1b_ref[...])     # f32
        # Fused QKV projection computed TRANSPOSED: (3C, C) @ (C, T) -> (3C, T).
        # The 1/sqrt(Dh) scale is already folded into the Q rows by the wrapper.
        qkvT = jnp.dot(wqkvT_ref[...], h1.T.astype(bf16),
                       preferred_element_type=jnp.float32) + bqkvT_ref[...]

        # Head-major scatter: sublane (row) slices + 2-D transposes + full-slab
        # stores.  No lane-offset sub-128 masked stores.
        for h in range(H):
            q_s[h] = qkvT[h * Dh:(h + 1) * Dh, :].T.astype(bf16)
            k_s[h] = qkvT[C + h * Dh:C + (h + 1) * Dh, :].T.astype(bf16)
            v_s[h] = qkvT[2 * C + h * Dh:2 * C + (h + 1) * Dh, :].T.astype(bf16)

        # 2-D causal mask for the diagonal tile only (hoisted out of both loops).
        rows = lax.broadcasted_iota(jnp.int32, (q_tile, q_tile), 0)
        cols = lax.broadcasted_iota(jnp.int32, (q_tile, q_tile), 1)
        diag_mask = cols > rows

        def q_step(qi, carry):
            q0 = pl.multiple_of(qi * q_tile, q_tile)
            qb = q_s[:, pl.ds(q0, q_tile), :]                 # (H, tq, Dh) bf16

            def kv_step(ki, c):
                m, l, acc = c
                k0 = pl.multiple_of(ki * q_tile, q_tile)
                kb = k_s[:, pl.ds(k0, q_tile), :]
                vb = v_s[:, pl.ds(k0, q_tile), :]
                s = jnp.einsum('hqd,hkd->hqk', qb, kb,
                               preferred_element_type=jnp.float32)
                # Mask only the diagonal k-tile; prefix tiles are fully visible.
                s = lax.cond(ki == qi,
                             lambda sv: jnp.where(diag_mask, NEG_INF, sv),
                             lambda sv: sv,
                             s)
                m_new = jnp.maximum(m, jnp.max(s, axis=-1, keepdims=True))
                alpha = jnp.exp(m - m_new)
                p = jnp.exp(s - m_new)
                l_new = alpha * l + jnp.sum(p, axis=-1, keepdims=True)
                acc_new = alpha * acc + jnp.einsum(
                    'hqk,hkd->hqd', p.astype(bf16), vb,
                    preferred_element_type=jnp.float32)
                return m_new, l_new, acc_new

            m0 = jnp.full((H, q_tile, 1), -jnp.inf, jnp.float32)
            l0 = jnp.zeros((H, q_tile, 1), jnp.float32)
            a0 = jnp.zeros((H, q_tile, Dh), jnp.float32)
            _, l, acc = lax.fori_loop(0, qi + 1, kv_step, (m0, l0, a0))

            o = acc * pl.reciprocal(l, approx=True)           # (H, tq, Dh) f32
            # Fused per-tile output projection: head-batched matmul + sum over
            # heads keeps everything lane-dense; no (H,tq,Dh)->(tq,C) relayout.
            attn_h = jnp.einsum('htd,hdc->htc', o.astype(bf16), woR_ref[...],
                                preferred_element_type=jnp.float32)
            attn = jnp.sum(attn_h, axis=0) + bo_ref[...]      # (tq, C) f32
            x2_s[pl.ds(q0, q_tile), :] = attn                 # lane-dense store
            return carry

        lax.fori_loop(0, T // q_tile, q_step, 0)

    pl.run_scoped(attention_phase,
                  pltpu.VMEM((H, T, Dh), bf16),
                  pltpu.VMEM((H, T, Dh), bf16),
                  pltpu.VMEM((H, T, Dh), bf16))

    # ------------- residual 1 + MLP phase ------------------------------------
    x2 = x_ref[0] + x2_s[...]                                 # x + attn, f32
    x2_s[...] = x2
    h2 = _layer_norm(x2, ln2w_ref[...], ln2b_ref[...]).astype(bf16)
    F4 = wfc_ref.shape[1]

    def mlp_step(ci, carry):
        c0 = pl.multiple_of(ci * mlp_chunk, mlp_chunk)
        f = jnp.dot(h2, wfc_ref[:, pl.ds(c0, mlp_chunk)],
                    preferred_element_type=jnp.float32) + bfc_ref[:, pl.ds(c0, mlp_chunk)]
        g = _gelu_exact(f)                                    # f32 (T, chunk)
        # accumulate MLP output (residual already in x2_s) in VMEM
        x2_s[...] += jnp.dot(g.astype(bf16), wpr_ref[pl.ds(c0, mlp_chunk), :],
                             preferred_element_type=jnp.float32)
        return carry

    lax.fori_loop(0, F4 // mlp_chunk, mlp_step, 0)
    out_ref[0] = (x2_s[...] + bpr_ref[...]).astype(out_ref.dtype)


# ---------------------------------------------------------------------------
# Wrapper
# ---------------------------------------------------------------------------
def _divisor_tile(n, pref):
    t = max(1, min(n, pref))
    while n % t:
        t -= 1
    return t


def _pad2(rows, cols, itemsize):
    return (-(-rows // 8) * 8) * (-(-cols // 128) * 128) * itemsize


def _vmem_estimate(T, C, H, Dh, TQ, CHUNK, x_itemsize):
    w = 2 * (_pad2(3 * C, C, 2) + H * _pad2(Dh, C, 2)
             + _pad2(C, 4 * C, 2) + _pad2(4 * C, C, 2))       # bf16 weights, dbl-buf
    b = 2 * (_pad2(3 * C, 1, 4) + 6 * _pad2(1, 4 * C, 4))     # biases / LN params
    io = 2 * 2 * _pad2(T, C, x_itemsize)                      # x in + out, dbl-buf
    x2 = _pad2(T, C, 4)                                       # f32 accumulator
    qkv_scr = 3 * H * _pad2(T, Dh, 2)                         # run_scoped q/k/v
    attn_tmp = (2 * _pad2(3 * C, T, 4)                        # qkvT f32 (+ slack)
                + 3 * _pad2(T, C, 4)                          # h1 / transposes
                + 3 * H * _pad2(TQ, TQ, 4)                    # s / p temporaries
                + 2 * H * _pad2(TQ, Dh, 4)                    # acc / o
                + H * _pad2(TQ, C, 4))                        # per-head proj
    mlp_tmp = 2 * _pad2(T, C, 4) + 3 * _pad2(T, CHUNK, 4)
    return w + b + io + x2 + max(qkv_scr + attn_tmp, mlp_tmp)


def gpt_block(x, params, n_head, *, vmem_budget_bytes=48 * 2 ** 20):
    B, T, C = x.shape
    H = n_head
    assert C % H == 0
    Dh = C // H
    bf16 = jnp.bfloat16
    scale = 1.0 / math.sqrt(Dh)

    # Fused QKV weight/bias, 1/sqrt(Dh) folded into the Q part, stored
    # TRANSPOSED so the in-kernel head split is a cheap sublane slice.
    w_qkv = jnp.concatenate([params["wq"] * scale, params["wk"], params["wv"]], axis=1)
    b_qkv = jnp.concatenate([params["bq"] * scale, params["bk"], params["bv"]], axis=1)
    wqkvT = jnp.transpose(w_qkv).astype(bf16)                 # (3C, C)
    bqkvT = jnp.transpose(b_qkv).astype(jnp.float32)          # (3C, 1)
    woR = params["wo"].reshape(H, Dh, C).astype(bf16)         # head-major out proj

    args = [
        params["ln1_w"].astype(jnp.float32), params["ln1_b"].astype(jnp.float32),
        wqkvT, bqkvT,
        woR, params["bo"].astype(jnp.float32),
        params["ln2_w"].astype(jnp.float32), params["ln2_b"].astype(jnp.float32),
        params["wfc"].astype(bf16), params["bfc"].astype(jnp.float32),
        params["wpr"].astype(bf16), params["bpr"].astype(jnp.float32),
    ]

    # Start at v6e-friendly tile sizes and shrink until the estimate fits the
    # (v7x-safe) budget; the query tile / MLP chunk must divide T / 4C.
    TQ = _divisor_tile(T, 256)
    CHUNK = _divisor_tile(4 * C, 1024)
    while (_vmem_estimate(T, C, H, Dh, TQ, CHUNK, x.dtype.itemsize) > vmem_budget_bytes
           and (CHUNK > 128 or TQ > 128)):
        if CHUNK > 128:
            CHUNK = _divisor_tile(4 * C, CHUNK // 2)
        else:
            TQ = _divisor_tile(T, TQ // 2)
    est = _vmem_estimate(T, C, H, Dh, TQ, CHUNK, x.dtype.itemsize)
    # Request what we actually need (never silently clamp to the physical
    # limit: if it does not fit, fail loudly instead of mis-tiling).
    vmem_limit = int(max(est, 16 * 2 ** 20))

    in_specs = [pl.BlockSpec((1, T, C), lambda b: (b, 0, 0))]
    for p in args:
        # Constant index_map: weights are DMA'd once and reused every batch step.
        in_specs.append(pl.BlockSpec(p.shape, lambda b, n=p.ndim: (0,) * n))

    return pl.pallas_call(
        functools.partial(gpt_block_kernel, H, TQ, CHUNK),
        out_shape=jax.ShapeDtypeStruct((B, T, C), x.dtype),
        grid=(B,),
        in_specs=in_specs,
        out_specs=pl.BlockSpec((1, T, C), lambda b: (b, 0, 0)),
        scratch_shapes=[pltpu.VMEM((T, C), jnp.float32)],     # attn / MLP accumulator
        compiler_params=pltpu.CompilerParams(
            dimension_semantics=("parallel",),
            vmem_limit_bytes=vmem_limit),
    )(x, *args)


# ---------------------------------------------------------------------------
# Pure-JAX reference (f32) for correctness checking
# ---------------------------------------------------------------------------
def gpt_block_ref(x, p, n_head):
    B, T, C = x.shape
    Dh = C // n_head

    def ln(v, w, b):
        mu = v.mean(-1, keepdims=True)
        var = ((v - mu) ** 2).mean(-1, keepdims=True)
        return (v - mu) / jnp.sqrt(var + LN_EPS) * w + b

    h1 = ln(x, p["ln1_w"], p["ln1_b"])
    q = h1 @ p["wq"] + p["bq"]
    k = h1 @ p["wk"] + p["bk"]
    v = h1 @ p["wv"] + p["bv"]
    q = q.reshape(B, T, n_head, Dh).transpose(0, 2, 1, 3)
    k = k.reshape(B, T, n_head, Dh).transpose(0, 2, 1, 3)
    v = v.reshape(B, T, n_head, Dh).transpose(0, 2, 1, 3)
    s = jnp.einsum("bhqd,bhkd->bhqk", q, k) / math.sqrt(Dh)
    mask = jnp.tril(jnp.ones((T, T), bool))
    s = jnp.where(mask, s, -jnp.inf)
    pattn = jax.nn.softmax(s, axis=-1)
    y = jnp.einsum("bhqk,bhkd->bhqd", pattn, v)
    y = y.transpose(0, 2, 1, 3).reshape(B, T, C)
    x = x + (y @ p["wo"] + p["bo"])
    h2 = ln(x, p["ln2_w"], p["ln2_b"])
    f = h2 @ p["wfc"] + p["bfc"]
    g = 0.5 * f * (1.0 + jax.lax.erf(f * INV_SQRT2))
    return x + (g @ p["wpr"] + p["bpr"])


def init_params(key, C, n_head):
    ks = jax.random.split(key, 12)
    std = 0.02
    return {
        "ln1_w": 1.0 + 0.1 * jax.random.normal(ks[8], (1, C), jnp.float32),
        "ln1_b": 0.1 * jax.random.normal(ks[9], (1, C), jnp.float32),
        "ln2_w": 1.0 + 0.1 * jax.random.normal(ks[10], (1, C), jnp.float32),
        "ln2_b": 0.1 * jax.random.normal(ks[11], (1, C), jnp.float32),
        # c_attn (C -> 3C) stored as q/k/v pieces (fused + transposed in wrapper)
        "wq": std * jax.random.normal(ks[0], (C, C), jnp.float32),
        "wk": std * jax.random.normal(ks[1], (C, C), jnp.float32),
        "wv": std * jax.random.normal(ks[2], (C, C), jnp.float32),
        "bq": std * jax.random.normal(ks[3], (1, C), jnp.float32),
        "bk": jnp.zeros((1, C), jnp.float32),
        "bv": jnp.zeros((1, C), jnp.float32),
        # attn c_proj (C -> C)
        "wo": std * jax.random.normal(ks[4], (C, C), jnp.float32),
        "bo": jnp.zeros((1, C), jnp.float32),
        # MLP c_fc (C -> 4C), c_proj (4C -> C)
        "wfc": std * jax.random.normal(ks[5], (C, 4 * C), jnp.float32),
        "bfc": std * jax.random.normal(ks[6], (1, 4 * C), jnp.float32),
        "wpr": std * jax.random.normal(ks[7], (4 * C, C), jnp.float32),
        "bpr": jnp.zeros((1, C), jnp.float32),
    }


if __name__ == "__main__":
    B, T, C, H = 2, 8, 32, 4   # small GPTConfig-like shapes: n_embd=32, n_head=4
    key = jax.random.PRNGKey(0)
    kx, kp = jax.random.split(key)
    x = jax.random.normal(kx, (B, T, C), jnp.float32)
    params = init_params(kp, C, H)

    out = jax.block_until_ready(gpt_block(x, params, H))

    ref = gpt_block_ref(x, params, H)
    assert out.shape == (B, T, C)
    # bf16 matmul operands + approx reciprocal vs. the pure-f32 reference.
    np.testing.assert_allclose(np.asarray(out), np.asarray(ref), atol=2e-2, rtol=2e-2)
    print("KERNEL_OK")
</pallas_src>

<mosaic_0001>
module attributes {stable_mosaic.version = 11 : i64} {
  func.func @gpt_block_kernel(%arg0: i32, %arg1: memref<1x8x32xf32, #tpu.memory_space<vmem>>, %arg2: memref<1x32xf32, #tpu.memory_space<vmem>>, %arg3: memref<1x32xf32, #tpu.memory_space<vmem>>, %arg4: memref<96x32xbf16, #tpu.memory_space<vmem>>, %arg5: memref<96x1xf32, #tpu.memory_space<vmem>>, %arg6: memref<4x8x32xbf16, #tpu.memory_space<vmem>>, %arg7: memref<1x32xf32, #tpu.memory_space<vmem>>, %arg8: memref<1x32xf32, #tpu.memory_space<vmem>>, %arg9: memref<1x32xf32, #tpu.memory_space<vmem>>, %arg10: memref<32x128xbf16, #tpu.memory_space<vmem>>, %arg11: memref<1x128xf32, #tpu.memory_space<vmem>>, %arg12: memref<128x32xbf16, #tpu.memory_space<vmem>>, %arg13: memref<1x32xf32, #tpu.memory_space<vmem>>, %arg14: memref<1x8x32xf32, #tpu.memory_space<vmem>>, %arg15: memref<8x32xf32, #tpu.memory_space<vmem>>) attributes {dimension_semantics = [#tpu.dimension_semantics<parallel>], iteration_bounds = array<i64: 2>, scalar_prefetch = 0 : i64, scratch_operands = 1 : i64, tpu.core_type = #tpu.core_type<tc>, window_params = [{transform_indices = @transform_0, window_bounds = array<i64: 1, 8, 32>}, {pipeline_mode = #tpu.pipeline_mode<synchronous>, transform_indices = @transform_1, window_bounds = array<i64: 1, 32>}, {pipeline_mode = #tpu.pipeline_mode<synchronous>, transform_indices = @transform_2, window_bounds = array<i64: 1, 32>}, {pipeline_mode = #tpu.pipeline_mode<synchronous>, transform_indices = @transform_3, window_bounds = array<i64: 96, 32>}, {pipeline_mode = #tpu.pipeline_mode<synchronous>, transform_indices = @transform_4, window_bounds = array<i64: 96, 1>}, {pipeline_mode = #tpu.pipeline_mode<synchronous>, transform_indices = @transform_5, window_bounds = array<i64: 4, 8, 32>}, {pipeline_mode = #tpu.pipeline_mode<synchronous>, transform_indices = @transform_6, window_bounds = array<i64: 1, 32>}, {pipeline_mode = #tpu.pipeline_mode<synchronous>, transform_indices = @transform_7, window_bounds = array<i64: 1, 32>}, {pipeline_mode = #tpu.pipeline_mode<synchronous>, transform_indices = @transform_8, window_bounds = array<i64: 1, 32>}, {pipeline_mode = #tpu.pipeline_mode<synchronous>, transform_indices = @transform_9, window_bounds = array<i64: 32, 128>}, {pipeline_mode = #tpu.pipeline_mode<synchronous>, transform_indices = @transform_10, window_bounds = array<i64: 1, 128>}, {pipeline_mode = #tpu.pipeline_mode<synchronous>, transform_indices = @transform_11, window_bounds = array<i64: 128, 32>}, {pipeline_mode = #tpu.pipeline_mode<synchronous>, transform_indices = @transform_12, window_bounds = array<i64: 1, 32>}, {transform_indices = @transform_13, window_bounds = array<i64: 1, 8, 32>}]} {
    "tpu.region"() ({
      %alloca = memref.alloca() : memref<4x8x8xbf16, #tpu.memory_space<vmem>>
      %alloca_33 = memref.alloca() : memref<4x8x8xbf16, #tpu.memory_space<vmem>>
      %alloca_34 = memref.alloca() : memref<4x8x8xbf16, #tpu.memory_space<vmem>>
      %c0_35 = arith.constant 0 : index
      %c0_36 = arith.constant 0 : index
      %c0_37 = arith.constant 0 : index
      %61 = vector.load %arg1[%c0_35, %c0_36, %c0_37] : memref<1x8x32xf32, #tpu.memory_space<vmem>>, vector<1x8x32xf32>
      %62 = vector.shape_cast %61 : vector<1x8x32xf32> to vector<8x32xf32>
      %c0_38 = arith.constant 0 : index
      %c0_39 = arith.constant 0 : index
      %63 = vector.load %arg2[%c0_38, %c0_39] : memref<1x32xf32, #tpu.memory_space<vmem>>, vector<1x32xf32>
      %c0_40 = arith.constant 0 : index
      %c0_41 = arith.constant 0 : index
      %64 = vector.load %arg3[%c0_40, %c0_41] : memref<1x32xf32, #tpu.memory_space<vmem>>, vector<1x32xf32>
      %cst_42 = arith.constant dense<0.000000e+00> : vector<8xf32>
      %65 = vector.multi_reduction <add>, %62, %cst_42 [1] : vector<8x32xf32> to vector<8xf32>
      %66 = vector.shape_cast %65 : vector<8xf32> to vector<8x1xf32>
      %cst_43 = arith.constant 3.200000e+01 : f32
      %67 = vector.broadcast %cst_43 : f32 to vector<8x1xf32>
      %68 = arith.divf %66, %67 : vector<8x1xf32>
      %69 = vector.broadcast %68 : vector<8x1xf32> to vector<8x32xf32>
      %70 = arith.subf %62, %69 : vector<8x32xf32>
      %71 = arith.mulf %70, %70 : vector<8x32xf32>
      %cst_44 = arith.constant dense<0.000000e+00> : vector<8xf32>
      %72 = vector.multi_reduction <add>, %71, %cst_44 [1] : vector<8x32xf32> to vector<8xf32>
      %73 = vector.shape_cast %72 : vector<8xf32> to vector<8x1xf32>
      %cst_45 = arith.constant 3.200000e+01 : f32
      %74 = vector.broadcast %cst_45 : f32 to vector<8x1xf32>
      %75 = arith.divf %73, %74 : vector<8x1xf32>
      %76 = vector.broadcast %68 : vector<8x1xf32> to vector<8x32xf32>
      %77 = arith.subf %62, %76 : vector<8x32xf32>
      %cst_46 = arith.constant 9.99999974E-6 : f32
      %78 = vector.broadcast %cst_46 : f32 to vector<8x1xf32>
      %79 = arith.addf %75, %78 : vector<8x1xf32>
      %80 = math.rsqrt %79 : vector<8x1xf32>
      %81 = vector.broadcast %80 : vector<8x1xf32> to vector<8x32xf32>
      %82 = arith.mulf %77, %81 : vector<8x32xf32>
      %83 = vector.broadcast %63 : vector<1x32xf32> to vector<8x32xf32>
      %84 = arith.mulf %82, %83 : vector<8x32xf32>
      %85 = vector.broadcast %64 : vector<1x32xf32> to vector<8x32xf32>
      %86 = arith.addf %84, %85 : vector<8x32xf32>
      %c0_47 = arith.constant 0 : index
      %c0_48 = arith.constant 0 : index
      %87 = vector.load %arg4[%c0_47, %c0_48] : memref<96x32xbf16, #tpu.memory_space<vmem>>, vector<96x32xbf16>
      %88 = tpu.transpose %86, [1, 0] : vector<8x32xf32> -> vector<32x8xf32>
      %89 = arith.truncf %88 : vector<32x8xf32> to vector<32x8xbf16>
      %cst_49 = arith.constant dense<0.000000e+00> : vector<96x8xf32>
      %90 = tpu.matmul %87, %89, %cst_49 {dimension_numbers = #tpu.dot_dimension_numbers<[1], [0], [0], [1], [0, 0, 1, 1], [], []>} : vector<96x32xbf16>, vector<32x8xbf16>, vector<96x8xf32> -> vector<96x8xf32>
      %c0_50 = arith.constant 0 : index
      %c0_51 = arith.constant 0 : index
      %91 = vector.load %arg5[%c0_50, %c0_51] : memref<96x1xf32, #tpu.memory_space<vmem>>, vector<96x1xf32>
      %92 = vector.broadcast %91 : vector<96x1xf32> to vector<96x8xf32>
      %93 = arith.addf %90, %92 : vector<96x8xf32>
      %94 = vector.extract_strided_slice %93 {offsets = [0, 0], sizes = [8, 8], strides = [1, 1]} : vector<96x8xf32> to vector<8x8xf32>
      %95 = tpu.transpose %94, [1, 0] : vector<8x8xf32> -> vector<8x8xf32>
      %96 = arith.truncf %95 : vector<8x8xf32> to vector<8x8xbf16>
      %c0_52 = arith.constant 0 : index
      %c0_53 = arith.constant 0 : index
      %c0_54 = arith.constant 0 : index
      %97 = vector.load %alloca[%c0_52, %c0_53, %c0_54] : memref<4x8x8xbf16, #tpu.memory_space<vmem>>, vector<1x8x8xbf16>
      %98 = vector.shape_cast %97 : vector<1x8x8xbf16> to vector<8x8xbf16>
      %99 = vector.shape_cast %96 : vector<8x8xbf16> to vector<1x8x8xbf16>
      tpu.vector_store %alloca[%c0_52, %c0_53, %c0_54], %99 {strides = array<i32>} : memref<4x8x8xbf16, #tpu.memory_space<vmem>>, vector<1x8x8xbf16>,
      %100 = vector.extract_strided_slice %93 {offsets = [32, 0], sizes = [8, 8], strides = [1, 1]} : vector<96x8xf32> to vector<8x8xf32>
      %101 = tpu.transpose %100, [1, 0] : vector<8x8xf32> -> vector<8x8xf32>
      %102 = arith.truncf %101 : vector<8x8xf32> to vector<8x8xbf16>
      %c0_55 = arith.constant 0 : index
      %c0_56 = arith.constant 0 : index
      %c0_57 = arith.constant 0 : index
      %103 = vector.load %alloca_33[%c0_55, %c0_56, %c0_57] : memref<4x8x8xbf16, #tpu.memory_space<vmem>>, vector<1x8x8xbf16>
      %104 = vector.shape_cast %103 : vector<1x8x8xbf16> to vector<8x8xbf16>
      %105 = vector.shape_cast %102 : vector<8x8xbf16> to vector<1x8x8xbf16>
      tpu.vector_store %alloca_33[%c0_55, %c0_56, %c0_57], %105 {strides = array<i32>} : memref<4x8x8xbf16, #tpu.memory_space<vmem>>, vector<1x8x8xbf16>,
      %106 = vector.extract_strided_slice %93 {offsets = [64, 0], sizes = [8, 8], strides = [1, 1]} : vector<96x8xf32> to vector<8x8xf32>
      %107 = tpu.transpose %106, [1, 0] : vector<8x8xf32> -> vector<8x8xf32>
      %108 = arith.truncf %107 : vector<8x8xf32> to vector<8x8xbf16>
      %c0_58 = arith.constant 0 : index
      %c0_59 = arith.constant 0 : index
      %c0_60 = arith.constant 0 : index
      %109 = vector.load %alloca_34[%c0_58, %c0_59, %c0_60] : memref<4x8x8xbf16, #tpu.memory_space<vmem>>, vector<1x8x8xbf16>
      %110 = vector.shape_cast %109 : vector<1x8x8xbf16> to vector<8x8xbf16>
      %111 = vector.shape_cast %108 : vector<8x8xbf16> to vector<1x8x8xbf16>
      tpu.vector_store %alloca_34[%c0_58, %c0_59, %c0_60], %111 {strides = array<i32>} : memref<4x8x8xbf16, #tpu.memory_space<vmem>>, vector<1x8x8xbf16>,
      %112 = vector.extract_strided_slice %93 {offsets = [8, 0], sizes = [8, 8], strides = [1, 1]} : vector<96x8xf32> to vector<8x8xf32>
      %113 = tpu.transpose %112, [1, 0] : vector<8x8xf32> -> vector<8x8xf32>
      %114 = arith.truncf %113 : vector<8x8xf32> to vector<8x8xbf16>
      %c1 = arith.constant 1 : index
      %c0_61 = arith.constant 0 : index
      %c0_62 = arith.constant 0 : index
      %115 = vector.load %alloca[%c1, %c0_61, %c0_62] : memref<4x8x8xbf16, #tpu.memory_space<vmem>>, vector<1x8x8xbf16>
      %116 = vector.shape_cast %115 : vector<1x8x8xbf16> to vector<8x8xbf16>
      %117 = vector.shape_cast %114 : vector<8x8xbf16> to vector<1x8x8xbf16>
      tpu.vector_store %alloca[%c1, %c0_61, %c0_62], %117 {strides = array<i32>} : memref<4x8x8xbf16, #tpu.memory_space<vmem>>, vector<1x8x8xbf16>,
      %118 = vector.extract_strided_slice %93 {offsets = [40, 0], sizes = [8, 8], strides = [1, 1]} : vector<96x8xf32> to vector<8x8xf32>
      %119 = tpu.transpose %118, [1, 0] : vector<8x8xf32> -> vector<8x8xf32>
      %120 = arith.truncf %119 : vector<8x8xf32> to vector<8x8xbf16>
      %c1_63 = arith.constant 1 : index
      %c0_64 = arith.constant 0 : index
      %c0_65 = arith.constant 0 : index
      %121 = vector.load %alloca_33[%c1_63, %c0_64, %c0_65] : memref<4x8x8xbf16, #tpu.memory_space<vmem>>, vector<1x8x8xbf16>
      %122 = vector.shape_cast %121 : vector<1x8x8xbf16> to vector<8x8xbf16>
      %123 = vector.shape_cast %120 : vector<8x8xbf16> to vector<1x8x8xbf16>
      tpu.vector_store %alloca_33[%c1_63, %c0_64, %c0_65], %123 {strides = array<i32>} : memref<4x8x8xbf16, #tpu.memory_space<vmem>>, vector<1x8x8xbf16>,
      %124 = vector.extract_strided_slice %93 {offsets = [72, 0], sizes = [8, 8], strides = [1, 1]} : vector<96x8xf32> to vector<8x8xf32>
      %125 = tpu.transpose %124, [1, 0] : vector<8x8xf32> -> vector<8x8xf32>
      %126 = arith.truncf %125 : vector<8x8xf32> to vector<8x8xbf16>
      %c1_66 = arith.constant 1 : index
      %c0_67 = arith.constant 0 : index
      %c0_68 = arith.constant 0 : index
      %127 = vector.load %alloca_34[%c1_66, %c0_67, %c0_68] : memref<4x8x8xbf16, #tpu.memory_space<vmem>>, vector<1x8x8xbf16>
      %128 = vector.shape_cast %127 : vector<1x8x8xbf16> to vector<8x8xbf16>
      %129 = vector.shape_cast %126 : vector<8x8xbf16> to vector<1x8x8xbf16>
      tpu.vector_store %alloca_34[%c1_66, %c0_67, %c0_68], %129 {strides = array<i32>} : memref<4x8x8xbf16, #tpu.memory_space<vmem>>, vector<1x8x8xbf16>,
      %130 = vector.extract_strided_slice %93 {offsets = [16, 0], sizes = [8, 8], strides = [1, 1]} : vector<96x8xf32> to vector<8x8xf32>
      %131 = tpu.transpose %130, [1, 0] : vector<8x8xf32> -> vector<8x8xf32>
      %132 = arith.truncf %131 : vector<8x8xf32> to vector<8x8xbf16>
      %c2 = arith.constant 2 : index
      %c0_69 = arith.constant 0 : index
      %c0_70 = arith.constant 0 : index
      %133 = vector.load %alloca[%c2, %c0_69, %c0_70] : memref<4x8x8xbf16, #tpu.memory_space<vmem>>, vector<1x8x8xbf16>
      %134 = vector.shape_cast %133 : vector<1x8x8xbf16> to vector<8x8xbf16>
      %135 = vector.shape_cast %132 : vector<8x8xbf16> to vector<1x8x8xbf16>
      tpu.vector_store %alloca[%c2, %c0_69, %c0_70], %135 {strides = array<i32>} : memref<4x8x8xbf16, #tpu.memory_space<vmem>>, vector<1x8x8xbf16>,
      %136 = vector.extract_strided_slice %93 {offsets = [48, 0], sizes = [8, 8], strides = [1, 1]} : vector<96x8xf32> to vector<8x8xf32>
      %137 = tpu.transpose %136, [1, 0] : vector<8x8xf32> -> vector<8x8xf32>
      %138 = arith.truncf %137 : vector<8x8xf32> to vector<8x8xbf16>
      %c2_71 = arith.constant 2 : index
      %c0_72 = arith.constant 0 : index
      %c0_73 = arith.constant 0 : index
      %139 = vector.load %alloca_33[%c2_71, %c0_72, %c0_73] : memref<4x8x8xbf16, #tpu.memory_space<vmem>>, vector<1x8x8xbf16>
      %140 = vector.shape_cast %139 : vector<1x8x8xbf16> to vector<8x8xbf16>
      %141 = vector.shape_cast %138 : vector<8x8xbf16> to vector<1x8x8xbf16>
      tpu.vector_store %alloca_33[%c2_71, %c0_72, %c0_73], %141 {strides = array<i32>} : memref<4x8x8xbf16, #tpu.memory_space<vmem>>, vector<1x8x8xbf16>,
      %142 = vector.extract_strided_slice %93 {offsets = [80, 0], sizes = [8, 8], strides = [1, 1]} : vector<96x8xf32> to vector<8x8xf32>
      %143 = tpu.transpose %142, [1, 0] : vector<8x8xf32> -> vector<8x8xf32>
      %144 = arith.truncf %143 : vector<8x8xf32> to vector<8x8xbf16>
      %c2_74 = arith.constant 2 : index
      %c0_75 = arith.constant 0 : index
      %c0_76 = arith.constant 0 : index
      %145 = vector.load %alloca_34[%c2_74, %c0_75, %c0_76] : memref<4x8x8xbf16, #tpu.memory_space<vmem>>, vector<1x8x8xbf16>
      %146 = vector.shape_cast %145 : vector<1x8x8xbf16> to vector<8x8xbf16>
      %147 = vector.shape_cast %144 : vector<8x8xbf16> to vector<1x8x8xbf16>
      tpu.vector_store %alloca_34[%c2_74, %c0_75, %c0_76], %147 {strides = array<i32>} : memref<4x8x8xbf16, #tpu.memory_space<vmem>>, vector<1x8x8xbf16>,
      %148 = vector.extract_strided_slice %93 {offsets = [24, 0], sizes = [8, 8], strides = [1, 1]} : vector<96x8xf32> to vector<8x8xf32>
      %149 = tpu.transpose %148, [1, 0] : vector<8x8xf32> -> vector<8x8xf32>
      %150 = arith.truncf %149 : vector<8x8xf32> to vector<8x8xbf16>
      %c3 = arith.constant 3 : index
      %c0_77 = arith.constant 0 : index
      %c0_78 = arith.constant 0 : index
      %151 = vector.load %alloca[%c3, %c0_77, %c0_78] : memref<4x8x8xbf16, #tpu.memory_space<vmem>>, vector<1x8x8xbf16>
      %152 = vector.shape_cast %151 : vector<1x8x8xbf16> to vector<8x8xbf16>
      %153 = vector.shape_cast %150 : vector<8x8xbf16> to vector<1x8x8xbf16>
      tpu.vector_store %alloca[%c3, %c0_77, %c0_78], %153 {strides = array<i32>} : memref<4x8x8xbf16, #tpu.memory_space<vmem>>, vector<1x8x8xbf16>,
      %154 = vector.extract_strided_slice %93 {offsets = [56, 0], sizes = [8, 8], strides = [1, 1]} : vector<96x8xf32> to vector<8x8xf32>
      %155 = tpu.transpose %154, [1, 0] : vector<8x8xf32> -> vector<8x8xf32>
      %156 = arith.truncf %155 : vector<8x8xf32> to vector<8x8xbf16>
      %c3_79 = arith.constant 3 : index
      %c0_80 = arith.constant 0 : index
      %c0_81 = arith.constant 0 : index
      %157 = vector.load %alloca_33[%c3_79, %c0_80, %c0_81] : memref<4x8x8xbf16, #tpu.memory_space<vmem>>, vector<1x8x8xbf16>
      %158 = vector.shape_cast %157 : vector<1x8x8xbf16> to vector<8x8xbf16>
      %159 = vector.shape_cast %156 : vector<8x8xbf16> to vector<1x8x8xbf16>
      tpu.vector_store %alloca_33[%c3_79, %c0_80, %c0_81], %159 {strides = array<i32>} : memref<4x8x8xbf16, #tpu.memory_space<vmem>>, vector<1x8x8xbf16>,
      %160 = vector.extract_strided_slice %93 {offsets = [88, 0], sizes = [8, 8], strides = [1, 1]} : vector<96x8xf32> to vector<8x8xf32>
      %161 = tpu.transpose %160, [1, 0] : vector<8x8xf32> -> vector<8x8xf32>
      %162 = arith.truncf %161 : vector<8x8xf32> to vector<8x8xbf16>
      %c3_82 = arith.constant 3 : index
      %c0_83 = arith.constant 0 : index
      %c0_84 = arith.constant 0 : index
      %163 = vector.load %alloca_34[%c3_82, %c0_83, %c0_84] : memref<4x8x8xbf16, #tpu.memory_space<vmem>>, vector<1x8x8xbf16>
      %164 = vector.shape_cast %163 : vector<1x8x8xbf16> to vector<8x8xbf16>
      %165 = vector.shape_cast %162 : vector<8x8xbf16> to vector<1x8x8xbf16>
      tpu.vector_store %alloca_34[%c3_82, %c0_83, %c0_84], %165 {strides = array<i32>} : memref<4x8x8xbf16, #tpu.memory_space<vmem>>, vector<1x8x8xbf16>,
      %166 = tpu.iota {dimensions = array<i32: 0>} : vector<8x8xi32>
      %167 = tpu.iota {dimensions = array<i32: 1>} : vector<8x8xi32>
      %168 = arith.cmpi sgt, %167, %166 : vector<8x8xi32>
      %c0_i32_85 = arith.constant 0 : i32
      %c0_i32_86 = arith.constant 0 : i32
      %c8_i32 = arith.constant 8 : i32
      %169 = arith.muli %c0_i32_86, %c8_i32 : i32
      %170 = tpu.assume_multiple %169, 8 : i32
      %c0_87 = arith.constant 0 : index
      %171 = arith.index_cast %170 : i32 to index
      %c0_88 = arith.constant 0 : index
      %172 = vector.load %alloca[%c0_87, %171, %c0_88] : memref<4x8x8xbf16, #tpu.memory_space<vmem>>, vector<4x8x8xbf16>
      %cst_89 = arith.constant 0xFF800000 : f32
      %173 = vector.broadcast %cst_89 : f32 to vector<4x8x1xf32>
      %cst_90 = arith.constant 0.000000e+00 : f32
      %174 = vector.broadcast %cst_90 : f32 to vector<4x8x1xf32>
      %cst_91 = arith.constant 0.000000e+00 : f32
      %175 = vector.broadcast %cst_91 : f32 to vector<4x8x8xf32>
      %c1_i32_92 = arith.constant 1 : i32
      %176 = arith.addi %c0_i32_86, %c1_i32_92 : i32
      %c0_i32_93 = arith.constant 0 : i32
      %177 = arith.subi %176, %c0_i32_93 : i32
      %178 = arith.addi %c0_i32_93, %177 : i32
      %c1_i32_94 = arith.constant 1 : i32
      %179:3 = scf.for %arg16 = %c0_i32_93 to %178 step %c1_i32_94 iter_args(%arg17 = %173, %arg18 = %174, %arg19 = %175) -> (vector<4x8x1xf32>, vector<4x8x1xf32>, vector<4x8x8xf32>)  : i32 {
        %c8_i32_104 = arith.constant 8 : i32
        %192 = arith.muli %arg16, %c8_i32_104 : i32
        %193 = tpu.assume_multiple %192, 8 : i32
        %c0_105 = arith.constant 0 : index
        %194 = arith.index_cast %193 : i32 to index
        %c0_106 = arith.constant 0 : index
        %195 = vector.load %alloca_33[%c0_105, %194, %c0_106] : memref<4x8x8xbf16, #tpu.memory_space<vmem>>, vector<4x8x8xbf16>
        %c0_107 = arith.constant 0 : index
        %196 = arith.index_cast %193 : i32 to index
        %c0_108 = arith.constant 0 : index
        %197 = vector.load %alloca_34[%c0_107, %196, %c0_108] : memref<4x8x8xbf16, #tpu.memory_space<vmem>>, vector<4x8x8xbf16>
        "tpu.trace_start"() <{level = 10 : i32, message = "hqd,hkd->hqk"}> : () -> ()
        %cst_109 = arith.constant dense<0.000000e+00> : vector<4x8x8xf32>
        %198 = tpu.matmul %172, %195, %cst_109 {dimension_numbers = #tpu.dot_dimension_numbers<[2], [2], [1], [1], [0, 0, 0, 1, 1, 1], [0], [0]>} : vector<4x8x8xbf16>, vector<4x8x8xbf16>, vector<4x8x8xf32> -> vector<4x8x8xf32>
        "tpu.trace_stop"() : () -> ()
        %199 = arith.cmpi eq, %arg16, %c0_i32_86 : i32
        %200 = arith.extui %199 : i1 to i32
        %c0_i32_110 = arith.constant 0 : i32
        %201 = arith.cmpi ne, %200, %c0_i32_110 : i32
        %202 = scf.if %201 -> (vector<4x8x8xf32>) {
          %cst_114 = arith.constant -1.000000e+30 : f32
          %220 = vector.shape_cast %168 : vector<8x8xi1> to vector<1x8x8xi1>
          %221 = vector.broadcast %220 : vector<1x8x8xi1> to vector<4x8x8xi1>
          %222 = vector.broadcast %cst_114 : f32 to vector<4x8x8xf32>
          %223 = arith.select %221, %222, %198 : vector<4x8x8xi1>, vector<4x8x8xf32>
          scf.yield %223 : vector<4x8x8xf32>
        } else {
          scf.yield %198 : vector<4x8x8xf32>
        }
        %cst_111 = arith.constant dense<0xFF800000> : vector<4x8xf32>
        %203 = vector.multi_reduction <maximumf>, %202, %cst_111 [2] : vector<4x8x8xf32> to vector<4x8xf32>
        %204 = vector.shape_cast %203 : vector<4x8xf32> to vector<4x8x1xf32>
        %205 = arith.maximumf %arg17, %204 : vector<4x8x1xf32>
        %206 = arith.subf %arg17, %205 : vector<4x8x1xf32>
        %207 = math.exp %206 : vector<4x8x1xf32>
        %208 = vector.broadcast %205 : vector<4x8x1xf32> to vector<4x8x8xf32>
        %209 = arith.subf %202, %208 : vector<4x8x8xf32>
        %210 = math.exp %209 : vector<4x8x8xf32>
        %211 = arith.mulf %207, %arg18 : vector<4x8x1xf32>
        %cst_112 = arith.constant dense<0.000000e+00> : vector<4x8xf32>
        %212 = vector.multi_reduction <add>, %210, %cst_112 [2] : vector<4x8x8xf32> to vector<4x8xf32>
        %213 = vector.shape_cast %212 : vector<4x8xf32> to vector<4x8x1xf32>
        %214 = arith.addf %211, %213 : vector<4x8x1xf32>
        %215 = vector.broadcast %207 : vector<4x8x1xf32> to vector<4x8x8xf32>
        %216 = arith.mulf %215, %arg19 : vector<4x8x8xf32>
        %217 = arith.truncf %210 : vector<4x8x8xf32> to vector<4x8x8xbf16>
        "tpu.trace_start"() <{level = 10 : i32, message = "hqk,hkd->hqd"}> : () -> ()
        %cst_113 = arith.constant dense<0.000000e+00> : vector<4x8x8xf32>
        %218 = tpu.matmul %217, %197, %cst_113 {dimension_numbers = #tpu.dot_dimension_numbers<[2], [1], [1], [2], [0, 0, 0, 1, 1, 2], [0], [0]>} : vector<4x8x8xbf16>, vector<4x8x8xbf16>, vector<4x8x8xf32> -> vector<4x8x8xf32>
        "tpu.trace_stop"() : () -> ()
        %219 = arith.addf %216, %218 : vector<4x8x8xf32>
        scf.yield %205, %214, %219 : vector<4x8x1xf32>, vector<4x8x1xf32>, vector<4x8x8xf32>
      }
      %180 = tpu.reciprocal %179#1 {approx = true} : vector<4x8x1xf32> -> vector<4x8x1xf32>
      %181 = vector.broadcast %180 : vector<4x8x1xf32> to vector<4x8x8xf32>
      %182 = arith.mulf %179#2, %181 : vector<4x8x8xf32>
      %183 = arith.truncf %182 : vector<4x8x8xf32> to vector<4x8x8xbf16>
      %c0_95 = arith.constant 0 : index
      %c0_96 = arith.constant 0 : index
      %c0_97 = arith.constant 0 : index
      %184 = vector.load %arg6[%c0_95, %c0_96, %c0_97] : memref<4x8x32xbf16, #tpu.memory_space<vmem>>, vector<4x8x32xbf16>
      "tpu.trace_start"() <{level = 10 : i32, message = "htd,hdc->htc"}> : () -> ()
      %cst_98 = arith.constant dense<0.000000e+00> : vector<4x8x32xf32>
      %185 = tpu.matmul %183, %184, %cst_98 {dimension_numbers = #tpu.dot_dimension_numbers<[2], [1], [1], [2], [0, 0, 0, 1, 1, 2], [0], [0]>} : vector<4x8x8xbf16>, vector<4x8x32xbf16>, vector<4x8x32xf32> -> vector<4x8x32xf32>
      "tpu.trace_stop"() : () -> ()
      %cst_99 = arith.constant dense<0.000000e+00> : vector<8x32xf32>
      %186 = vector.multi_reduction <add>, %185, %cst_99 [0] : vector<4x8x32xf32> to vector<8x32xf32>
      %c0_100 = arith.constant 0 : index
      %c0_101 = arith.constant 0 : index
      %187 = vector.load %arg7[%c0_100, %c0_101] : memref<1x32xf32, #tpu.memory_space<vmem>>, vector<1x32xf32>
      %188 = vector.broadcast %187 : vector<1x32xf32> to vector<8x32xf32>
      %189 = arith.addf %186, %188 : vector<8x32xf32>
      %190 = arith.index_cast %170 : i32 to index
      %c0_102 = arith.constant 0 : index
      %191 = vector.load %arg15[%190, %c0_102] : memref<8x32xf32, #tpu.memory_space<vmem>>, vector<8x32xf32>
      tpu.vector_store %arg15[%190, %c0_102], %189 {strides = array<i32>} : memref<8x32xf32, #tpu.memory_space<vmem>>, vector<8x32xf32>,
      %c1_i32_103 = arith.constant 1 : i32
      tpu.yield
    }) : () -> ()
    %c0 = arith.constant 0 : index
    %c0_0 = arith.constant 0 : index
    %c0_1 = arith.constant 0 : index
    %0 = vector.load %arg1[%c0, %c0_0, %c0_1] : memref<1x8x32xf32, #tpu.memory_space<vmem>>, vector<1x8x32xf32>
    %1 = vector.shape_cast %0 : vector<1x8x32xf32> to vector<8x32xf32>
    %c0_2 = arith.constant 0 : index
    %c0_3 = arith.constant 0 : index
    %2 = vector.load %arg15[%c0_2, %c0_3] : memref<8x32xf32, #tpu.memory_space<vmem>>, vector<8x32xf32>
    %3 = arith.addf %1, %2 : vector<8x32xf32>
    %c0_4 = arith.constant 0 : index
    %c0_5 = arith.constant 0 : index
    %4 = vector.load %arg15[%c0_4, %c0_5] : memref<8x32xf32, #tpu.memory_space<vmem>>, vector<8x32xf32>
    tpu.vector_store %arg15[%c0_4, %c0_5], %3 {strides = array<i32>} : memref<8x32xf32, #tpu.memory_space<vmem>>, vector<8x32xf32>,
    %c0_6 = arith.constant 0 : index
    %c0_7 = arith.constant 0 : index
    %5 = vector.load %arg8[%c0_6, %c0_7] : memref<1x32xf32, #tpu.memory_space<vmem>>, vector<1x32xf32>
    %c0_8 = arith.constant 0 : index
    %c0_9 = arith.constant 0 : index
    %6 = vector.load %arg9[%c0_8, %c0_9] : memref<1x32xf32, #tpu.memory_space<vmem>>, vector<1x32xf32>
    %cst = arith.constant dense<0.000000e+00> : vector<8xf32>
    %7 = vector.multi_reduction <add>, %3, %cst [1] : vector<8x32xf32> to vector<8xf32>
    %8 = vector.shape_cast %7 : vector<8xf32> to vector<8x1xf32>
    %cst_10 = arith.constant 3.200000e+01 : f32
    %9 = vector.broadcast %cst_10 : f32 to vector<8x1xf32>
    %10 = arith.divf %8, %9 : vector<8x1xf32>
    %11 = vector.broadcast %10 : vector<8x1xf32> to vector<8x32xf32>
    %12 = arith.subf %3, %11 : vector<8x32xf32>
    %13 = arith.mulf %12, %12 : vector<8x32xf32>
    %cst_11 = arith.constant dense<0.000000e+00> : vector<8xf32>
    %14 = vector.multi_reduction <add>, %13, %cst_11 [1] : vector<8x32xf32> to vector<8xf32>
    %15 = vector.shape_cast %14 : vector<8xf32> to vector<8x1xf32>
    %cst_12 = arith.constant 3.200000e+01 : f32
    %16 = vector.broadcast %cst_12 : f32 to vector<8x1xf32>
    %17 = arith.divf %15, %16 : vector<8x1xf32>
    %18 = vector.broadcast %10 : vector<8x1xf32> to vector<8x32xf32>
    %19 = arith.subf %3, %18 : vector<8x32xf32>
    %cst_13 = arith.constant 9.99999974E-6 : f32
    %20 = vector.broadcast %cst_13 : f32 to vector<8x1xf32>
    %21 = arith.addf %17, %20 : vector<8x1xf32>
    %22 = math.rsqrt %21 : vector<8x1xf32>
    %23 = vector.broadcast %22 : vector<8x1xf32> to vector<8x32xf32>
    %24 = arith.mulf %19, %23 : vector<8x32xf32>
    %25 = vector.broadcast %5 : vector<1x32xf32> to vector<8x32xf32>
    %26 = arith.mulf %24, %25 : vector<8x32xf32>
    %27 = vector.broadcast %6 : vector<1x32xf32> to vector<8x32xf32>
    %28 = arith.addf %26, %27 : vector<8x32xf32>
    %29 = arith.truncf %28 : vector<8x32xf32> to vector<8x32xbf16>
    %c0_i32 = arith.constant 0 : i32
    %c128_i32 = arith.constant 128 : i32
    %30 = arith.muli %c0_i32, %c128_i32 : i32
    %31 = tpu.assume_multiple %30, 128 : i32
    %c0_14 = arith.constant 0 : index
    %32 = arith.index_cast %31 : i32 to index
    %33 = vector.load %arg10[%c0_14, %32] : memref<32x128xbf16, #tpu.memory_space<vmem>>, vector<32x128xbf16>
    %cst_15 = arith.constant dense<0.000000e+00> : vector<8x128xf32>
    %34 = tpu.matmul %29, %33, %cst_15 {dimension_numbers = #tpu.dot_dimension_numbers<[1], [0], [0], [1], [0, 0, 1, 1], [], []>} : vector<8x32xbf16>, vector<32x128xbf16>, vector<8x128xf32> -> vector<8x128xf32>
    %c0_16 = arith.constant 0 : index
    %35 = arith.index_cast %31 : i32 to index
    %36 = vector.load %arg11[%c0_16, %35] : memref<1x128xf32, #tpu.memory_space<vmem>>, vector<1x128xf32>
    %37 = vector.broadcast %36 : vector<1x128xf32> to vector<8x128xf32>
    %38 = arith.addf %34, %37 : vector<8x128xf32>
    %cst_17 = arith.constant 5.000000e-01 : f32
    %39 = vector.broadcast %cst_17 : f32 to vector<8x128xf32>
    %40 = arith.mulf %39, %38 : vector<8x128xf32>
    %cst_18 = arith.constant 0.707106769 : f32
    %41 = vector.broadcast %cst_18 : f32 to vector<8x128xf32>
    %42 = arith.mulf %38, %41 : vector<8x128xf32>
    %43 = math.erf %42 : vector<8x128xf32>
    %cst_19 = arith.constant 1.000000e+00 : f32
    %44 = vector.broadcast %cst_19 : f32 to vector<8x128xf32>
    %45 = arith.addf %44, %43 : vector<8x128xf32>
    %46 = arith.mulf %40, %45 : vector<8x128xf32>
    %c0_20 = arith.constant 0 : index
    %c0_21 = arith.constant 0 : index
    %47 = vector.load %arg15[%c0_20, %c0_21] : memref<8x32xf32, #tpu.memory_space<vmem>>, vector<8x32xf32>
    %48 = arith.truncf %46 : vector<8x128xf32> to vector<8x128xbf16>
    %49 = arith.index_cast %31 : i32 to index
    %c0_22 = arith.constant 0 : index
    %50 = vector.load %arg12[%49, %c0_22] : memref<128x32xbf16, #tpu.memory_space<vmem>>, vector<128x32xbf16>
    %cst_23 = arith.constant dense<0.000000e+00> : vector<8x32xf32>
    %51 = tpu.matmul %48, %50, %cst_23 {dimension_numbers = #tpu.dot_dimension_numbers<[1], [0], [0], [1], [0, 0, 1, 1], [], []>} : vector<8x128xbf16>, vector<128x32xbf16>, vector<8x32xf32> -> vector<8x32xf32>
    %52 = arith.addf %47, %51 : vector<8x32xf32>
    %c0_24 = arith.constant 0 : index
    %c0_25 = arith.constant 0 : index
    %53 = vector.load %arg15[%c0_24, %c0_25] : memref<8x32xf32, #tpu.memory_space<vmem>>, vector<8x32xf32>
    tpu.vector_store %arg15[%c0_24, %c0_25], %52 {strides = array<i32>} : memref<8x32xf32, #tpu.memory_space<vmem>>, vector<8x32xf32>,
    %c1_i32 = arith.constant 1 : i32
    %c0_26 = arith.constant 0 : index
    %c0_27 = arith.constant 0 : index
    %54 = vector.load %arg15[%c0_26, %c0_27] : memref<8x32xf32, #tpu.memory_space<vmem>>, vector<8x32xf32>
    %c0_28 = arith.constant 0 : index
    %c0_29 = arith.constant 0 : index
    %55 = vector.load %arg13[%c0_28, %c0_29] : memref<1x32xf32, #tpu.memory_space<vmem>>, vector<1x32xf32>
    %56 = vector.broadcast %55 : vector<1x32xf32> to vector<8x32xf32>
    %57 = arith.addf %54, %56 : vector<8x32xf32>
    %c0_30 = arith.constant 0 : index
    %c0_31 = arith.constant 0 : index
    %c0_32 = arith.constant 0 : index
    %58 = vector.load %arg14[%c0_30, %c0_31, %c0_32] : memref<1x8x32xf32, #tpu.memory_space<vmem>>, vector<1x8x32xf32>
    %59 = vector.shape_cast %58 : vector<1x8x32xf32> to vector<8x32xf32>
    %60 = vector.shape_cast %57 : vector<8x32xf32> to vector<1x8x32xf32>
    tpu.vector_store %arg14[%c0_30, %c0_31, %c0_32], %60 {strides = array<i32>} : memref<1x8x32xf32, #tpu.memory_space<vmem>>, vector<1x8x32xf32>,
    return
  }
  func.func @transform_0(%arg0: i32) -> (i32, i32, i32) {
    %c0_i32 = arith.constant 0 : i32
    %c0_i32_0 = arith.constant 0 : i32
    %c0_i32_1 = arith.constant 0 : i32
    return %arg0, %c0_i32, %c0_i32_0 : i32, i32, i32
  }
  func.func @transform_1(%arg0: i32) -> (i32, i32) {
    %c0_i32 = arith.constant 0 : i32
    %c0_i32_0 = arith.constant 0 : i32
    %c0_i32_1 = arith.constant 0 : i32
    return %c0_i32, %c0_i32_0 : i32, i32
  }
  func.func @transform_2(%arg0: i32) -> (i32, i32) {
    %c0_i32 = arith.constant 0 : i32
    %c0_i32_0 = arith.constant 0 : i32
    %c0_i32_1 = arith.constant 0 : i32
    return %c0_i32, %c0_i32_0 : i32, i32
  }
  func.func @transform_3(%arg0: i32) -> (i32, i32) {
    %c0_i32 = arith.constant 0 : i32
    %c0_i32_0 = arith.constant 0 : i32
    %c0_i32_1 = arith.constant 0 : i32
    return %c0_i32, %c0_i32_0 : i32, i32
  }
  func.func @transform_4(%arg0: i32) -> (i32, i32) {
    %c0_i32 = arith.constant 0 : i32
    %c0_i32_0 = arith.constant 0 : i32
    %c0_i32_1 = arith.constant 0 : i32
    return %c0_i32, %c0_i32_0 : i32, i32
  }
  func.func @transform_5(%arg0: i32) -> (i32, i32, i32) {
    %c0_i32 = arith.constant 0 : i32
    %c0_i32_0 = arith.constant 0 : i32
    %c0_i32_1 = arith.constant 0 : i32
    %c0_i32_2 = arith.constant 0 : i32
    return %c0_i32, %c0_i32_0, %c0_i32_1 : i32, i32, i32
  }
  func.func @transform_6(%arg0: i32) -> (i32, i32) {
    %c0_i32 = arith.constant 0 : i32
    %c0_i32_0 = arith.constant 0 : i32
    %c0_i32_1 = arith.constant 0 : i32
    return %c0_i32, %c0_i32_0 : i32, i32
  }
  func.func @transform_7(%arg0: i32) -> (i32, i32) {
    %c0_i32 = arith.constant 0 : i32
    %c0_i32_0 = arith.constant 0 : i32
    %c0_i32_1 = arith.constant 0 : i32
    return %c0_i32, %c0_i32_0 : i32, i32
  }
  func.func @transform_8(%arg0: i32) -> (i32, i32) {
    %c0_i32 = arith.constant 0 : i32
    %c0_i32_0 = arith.constant 0 : i32
    %c0_i32_1 = arith.constant 0 : i32
    return %c0_i32, %c0_i32_0 : i32, i32
  }
  func.func @transform_9(%arg0: i32) -> (i32, i32) {
    %c0_i32 = arith.constant 0 : i32
    %c0_i32_0 = arith.constant 0 : i32
    %c0_i32_1 = arith.constant 0 : i32
    return %c0_i32, %c0_i32_0 : i32, i32
  }
  func.func @transform_10(%arg0: i32) -> (i32, i32) {
    %c0_i32 = arith.constant 0 : i32
    %c0_i32_0 = arith.constant 0 : i32
    %c0_i32_1 = arith.constant 0 : i32
    return %c0_i32, %c0_i32_0 : i32, i32
  }
  func.func @transform_11(%arg0: i32) -> (i32, i32) {
    %c0_i32 = arith.constant 0 : i32
    %c0_i32_0 = arith.constant 0 : i32
    %c0_i32_1 = arith.constant 0 : i32
    return %c0_i32, %c0_i32_0 : i32, i32
  }
  func.func @transform_12(%arg0: i32) -> (i32, i32) {
    %c0_i32 = arith.constant 0 : i32
    %c0_i32_0 = arith.constant 0 : i32
    %c0_i32_1 = arith.constant 0 : i32
    return %c0_i32, %c0_i32_0 : i32, i32
  }
  func.func @transform_13(%arg0: i32) -> (i32, i32, i32) {
    %c0_i32 = arith.constant 0 : i32
    %c0_i32_0 = arith.constant 0 : i32
    %c0_i32_1 = arith.constant 0 : i32
    return %arg0, %c0_i32, %c0_i32_0 : i32, i32, i32
  }
}

</mosaic_0001>

<llo_original>
// kernel: tpu_custom_call.1
$region0: #{tpu_custom_call.1}
  #allocation0 [shape = 'u32[]', space=smem, size = 0x4, offset = 0x4, fixed_abs, tag = 'smem constant byte address 0x4 - core index']
  #allocation1 [shape = 'u32[144,128]{1,0:T(1,128)}', space=vmem, size = 0x12000, scoped, tag = 'internal scratch']
  #allocation2 [shape = 'f32[8,32]{1,0:T(8,128)}', space=vmem, size = 0x1000, scoped, tag = 'scratch operand']
  %s0 = inlined_call_operand.vmem [shape: f32[2,8,32], index: 0, kind: input, shape index: {}]
  %s1 = inlined_call_operand.vmem [shape: f32[1,32], index: 1, kind: input, shape index: {}]
  %s2 = inlined_call_operand.vmem [shape: f32[1,32], index: 2, kind: input, shape index: {}]
  %s3 = inlined_call_operand.vmem [shape: bf16[96,32], index: 3, kind: input, shape index: {}]
  %s4 = inlined_call_operand.vmem [shape: f32[96,1], index: 4, kind: input, shape index: {}]
  %s5 = inlined_call_operand.vmem [shape: bf16[4,8,32], index: 5, kind: input, shape index: {}]
  %s6 = inlined_call_operand.vmem [shape: f32[1,32], index: 6, kind: input, shape index: {}]
  %s7 = inlined_call_operand.vmem [shape: f32[1,32], index: 7, kind: input, shape index: {}]
  %s8 = inlined_call_operand.vmem [shape: f32[1,32], index: 8, kind: input, shape index: {}]
  %s9 = inlined_call_operand.vmem [shape: bf16[32,128], index: 9, kind: input, shape index: {}]
  %s10 = inlined_call_operand.vmem [shape: f32[1,128], index: 10, kind: input, shape index: {}]
  %s11 = inlined_call_operand.vmem [shape: bf16[128,32], index: 11, kind: input, shape index: {}]
  %s12 = inlined_call_operand.vmem [shape: f32[1,32], index: 12, kind: input, shape index: {}]
  %s13 = inlined_call_operand.hbm [shape: f32[2,8,32], index: 13, kind: output, shape index: {}]
  %s14 = sld [smem:[#allocation0]]
  $region86: #{tpu_custom_call.1} parent=0
    _
  %s16 = ssub.s32 1, %s14
  %s17 = scalar_select 0, %s16, %s14
  $region1: #{tpu_custom_call.1} parent=0
    #allocation3 [shape = 'u8[8192]{0}', space=vmem, size = 0x2000, scoped, tag = 'output window, operand 0']
    #allocation4 [shape = 's32[2]{0}', space=sflag, size = 0x8, scoped, tag = 'scoped memory for tpu_custom_call.1']
    %18 = vsyncpa [#allocation4], 0
    %s19 = scalar_lea.sflag [#allocation4], 1
    %20 = vsyncpa %s19, 0
    loop: start=0, step=1, limit=4
    $region2: #{tpu_custom_call.1} parent=1 // loop_pre_header
      _
    $region3: #{tpu_custom_call.1} parent=1 // loop_header
      %s22 = sphi 0, %s26
      %p23 = scmp.ge.s32.totalorder %s22, 4
      %s32 = sphi 0, %s34
      %s35 = sphi 0, %s32
      %s36 = sphi 0, %s35
      %s52 = sphi 0, %s36
      %s56 = sphi 0, %s56
      %s58 = sphi 0, %s56
      %s59 = sphi 0, %s58
      %s73 = sphi 0, %s59
      %s77 = sphi 0, %s77
      %s79 = sphi 0, %s77
      %s80 = sphi 0, %s79
      %s94 = sphi 0, %s80
      %s98 = sphi 0, %s98
      %s100 = sphi 0, %s98
      %s101 = sphi 0, %s100
      %s115 = sphi 0, %s101
      %s119 = sphi 0, %s119
      %s121 = sphi 0, %s119
      %s122 = sphi 0, %s121
      %s136 = sphi 0, %s122
      %s140 = sphi 0, %s140
      %s142 = sphi 0, %s140
      %s143 = sphi 0, %s142
      %s157 = sphi 0, %s143
      %s161 = sphi 0, %s161
      %s163 = sphi 0, %s161
      %s164 = sphi 0, %s163
      %s178 = sphi 0, %s164
      %s182 = sphi 0, %s182
      %s184 = sphi 0, %s182
      %s185 = sphi 0, %s184
      %s199 = sphi 0, %s185
      %s203 = sphi 0, %s203
      %s205 = sphi 0, %s203
      %s206 = sphi 0, %s205
      %s220 = sphi 0, %s206
      %s224 = sphi 0, %s224
      %s226 = sphi 0, %s224
      %s227 = sphi 0, %s226
      %s241 = sphi 0, %s227
      %s245 = sphi 0, %s245
      %s247 = sphi 0, %s245
      %s248 = sphi 0, %s247
      %s262 = sphi 0, %s248
      %s266 = sphi 0, %s266
      %s268 = sphi 0, %s266
      %s269 = sphi 0, %s268
      %s283 = sphi 0, %s269
      %s287 = sphi 0, %s287
      %s289 = sphi 0, %s287
      %s290 = sphi 0, %s289
      %s304 = sphi 0, %s290
      %s310 = sphi 0, %s312
      %s313 = sphi 0, %s310
      %s314 = sphi 0, %s313
      %s330 = sphi 0, %s314
    $region4: #{tpu_custom_call.1} parent=1 // loop_header_branch
      %25 = sbr.rel (%p23) target = $region8
    $region5: #{tpu_custom_call.1} parent=1 // loop_body
      %s27 = ssub.s32 %s22, 1
      %s28 = ssub.s32 %s22, 2
      %s29 = sadd.s32 %s22, 1
      %s30 = ssub.s32 %s22, %s29
      %p31 = scmp.eq.s32.totalorder %s30, 0
      %s33 = sadd.s32 %s32, 1
      %s34 = scalar_select %p31, %s32, %s33
      %p37 = pneg %p31
      %p38 = scmp.eq.s32.totalorder %s22, 1
      %p39 = por %p37, %p38
      %p40 = scmp.ne.s32.totalorder %s32, %s35
      %p41 = scmp.eq.s32.totalorder %s22, 0
      %p42 = por %p40, %p41
      %p43 = scmp.ne.s32.totalorder %s32, %s35
      %p44 = scmp.eq.s32.totalorder %s27, 1
      %p45 = por %p43, %p44
      %p46 = scmp.ne.s32.totalorder %s35, %s36
      %p47 = scmp.eq.s32.totalorder %s27, 0
      %p48 = por %p46, %p47
      %p49 = scmp.ne.s32.totalorder %s35, %s36
      %p50 = scmp.eq.s32.totalorder %s28, 1
      %p51 = por %p49, %p50
      %p53 = scmp.ne.s32.totalorder %s36, %s52
      %p54 = scmp.eq.s32.totalorder %s28, 0
      %p55 = por %p53, %p54
      %s57 = sadd.s32 %s56, 1
      %p60 = scmp.eq.s32.totalorder %s22, 1
      %p61 = scmp.ne.s32.totalorder %s56, %s58
      %p62 = scmp.eq.s32.totalorder %s22, 0
      %p63 = por %p61, %p62
      %p64 = scmp.ne.s32.totalorder %s56, %s58
      %p65 = scmp.eq.s32.totalorder %s27, 1
      %p66 = por %p64, %p65
      %p67 = scmp.ne.s32.totalorder %s58, %s59
      %p68 = scmp.eq.s32.totalorder %s27, 0
      %p69 = por %p67, %p68
      %p70 = scmp.ne.s32.totalorder %s58, %s59
      %p71 = scmp.eq.s32.totalorder %s28, 1
      %p72 = por %p70, %p71
      %p74 = scmp.ne.s32.totalorder %s59, %s73
      %p75 = scmp.eq.s32.totalorder %s28, 0
      %p76 = por %p74, %p75
      %s78 = sadd.s32 %s77, 1
      %p81 = scmp.eq.s32.totalorder %s22, 1
      %p82 = scmp.ne.s32.totalorder %s77, %s79
      %p83 = scmp.eq.s32.totalorder %s22, 0
      %p84 = por %p82, %p83
      %p85 = scmp.ne.s32.totalorder %s77, %s79
      %p86 = scmp.eq.s32.totalorder %s27, 1
      %p87 = por %p85, %p86
      %p88 = scmp.ne.s32.totalorder %s79, %s80
      %p89 = scmp.eq.s32.totalorder %s27, 0
      %p90 = por %p88, %p89
      %p91 = scmp.ne.s32.totalorder %s79, %s80
      %p92 = scmp.eq.s32.totalorder %s28, 1
      %p93 = por %p91, %p92
      %p95 = scmp.ne.s32.totalorder %s80, %s94
      %p96 = scmp.eq.s32.totalorder %s28, 0
      %p97 = por %p95, %p96
      %s99 = sadd.s32 %s98, 1
      %p102 = scmp.eq.s32.totalorder %s22, 1
      %p103 = scmp.ne.s32.totalorder %s98, %s100
      %p104 = scmp.eq.s32.totalorder %s22, 0
      %p105 = por %p103, %p104
      %p106 = scmp.ne.s32.totalorder %s98, %s100
      %p107 = scmp.eq.s32.totalorder %s27, 1
      %p108 = por %p106, %p107
      %p109 = scmp.ne.s32.totalorder %s100, %s101
      %p110 = scmp.eq.s32.totalorder %s27, 0
      %p111 = por %p109, %p110
      %p112 = scmp.ne.s32.totalorder %s100, %s101
      %p113 = scmp.eq.s32.totalorder %s28, 1
      %p114 = por %p112, %p113
      %p116 = scmp.ne.s32.totalorder %s101, %s115
      %p117 = scmp.eq.s32.totalorder %s28, 0
      %p118 = por %p116, %p117
      %s120 = sadd.s32 %s119, 1
      %p123 = scmp.eq.s32.totalorder %s22, 1
      %p124 = scmp.ne.s32.totalorder %s119, %s121
      %p125 = scmp.eq.s32.totalorder %s22, 0
      %p126 = por %p124, %p125
      %p127 = scmp.ne.s32.totalorder %s119, %s121
      %p128 = scmp.eq.s32.totalorder %s27, 1
      %p129 = por %p127, %p128
      %p130 = scmp.ne.s32.totalorder %s121, %s122
      %p131 = scmp.eq.s32.totalorder %s27, 0
      %p132 = por %p130, %p131
      %p133 = scmp.ne.s32.totalorder %s121, %s122
      %p134 = scmp.eq.s32.totalorder %s28, 1
      %p135 = por %p133, %p134
      %p137 = scmp.ne.s32.totalorder %s122, %s136
      %p138 = scmp.eq.s32.totalorder %s28, 0
      %p139 = por %p137, %p138
      %s141 = sadd.s32 %s140, 1
      %p144 = scmp.eq.s32.totalorder %s22, 1
      %p145 = scmp.ne.s32.totalorder %s140, %s142
      %p146 = scmp.eq.s32.totalorder %s22, 0
      %p147 = por %p145, %p146
      %p148 = scmp.ne.s32.totalorder %s140, %s142
      %p149 = scmp.eq.s32.totalorder %s27, 1
      %p150 = por %p148, %p149
      %p151 = scmp.ne.s32.totalorder %s142, %s143
      %p152 = scmp.eq.s32.totalorder %s27, 0
      %p153 = por %p151, %p152
      %p154 = scmp.ne.s32.totalorder %s142, %s143
      %p155 = scmp.eq.s32.totalorder %s28, 1
      %p156 = por %p154, %p155
      %p158 = scmp.ne.s32.totalorder %s143, %s157
      %p159 = scmp.eq.s32.totalorder %s28, 0
      %p160 = por %p158, %p159
      %s162 = sadd.s32 %s161, 1
      %p165 = scmp.eq.s32.totalorder %s22, 1
      %p166 = scmp.ne.s32.totalorder %s161, %s163
      %p167 = scmp.eq.s32.totalorder %s22, 0
      %p168 = por %p166, %p167
      %p169 = scmp.ne.s32.totalorder %s161, %s163
      %p170 = scmp.eq.s32.totalorder %s27, 1
      %p171 = por %p169, %p170
      %p172 = scmp.ne.s32.totalorder %s163, %s164
      %p173 = scmp.eq.s32.totalorder %s27, 0
      %p174 = por %p172, %p173
      %p175 = scmp.ne.s32.totalorder %s163, %s164
      %p176 = scmp.eq.s32.totalorder %s28, 1
      %p177 = por %p175, %p176
      %p179 = scmp.ne.s32.totalorder %s164, %s178
      %p180 = scmp.eq.s32.totalorder %s28, 0
      %p181 = por %p179, %p180
      %s183 = sadd.s32 %s182, 1
      %p186 = scmp.eq.s32.totalorder %s22, 1
      %p187 = scmp.ne.s32.totalorder %s182, %s184
      %p188 = scmp.eq.s32.totalorder %s22, 0
      %p189 = por %p187, %p188
      %p190 = scmp.ne.s32.totalorder %s182, %s184
      %p191 = scmp.eq.s32.totalorder %s27, 1
      %p192 = por %p190, %p191
      %p193 = scmp.ne.s32.totalorder %s184, %s185
      %p194 = scmp.eq.s32.totalorder %s27, 0
      %p195 = por %p193, %p194
      %p196 = scmp.ne.s32.totalorder %s184, %s185
      %p197 = scmp.eq.s32.totalorder %s28, 1
      %p198 = por %p196, %p197
      %p200 = scmp.ne.s32.totalorder %s185, %s199
      %p201 = scmp.eq.s32.totalorder %s28, 0
      %p202 = por %p200, %p201
      %s204 = sadd.s32 %s203, 1
      %p207 = scmp.eq.s32.totalorder %s22, 1
      %p208 = scmp.ne.s32.totalorder %s203, %s205
      %p209 = scmp.eq.s32.totalorder %s22, 0
      %p210 = por %p208, %p209
      %p211 = scmp.ne.s32.totalorder %s203, %s205
      %p212 = scmp.eq.s32.totalorder %s27, 1
      %p213 = por %p211, %p212
      %p214 = scmp.ne.s32.totalorder %s205, %s206
      %p215 = scmp.eq.s32.totalorder %s27, 0
      %p216 = por %p214, %p215
      %p217 = scmp.ne.s32.totalorder %s205, %s206
      %p218 = scmp.eq.s32.totalorder %s28, 1
      %p219 = por %p217, %p218
      %p221 = scmp.ne.s32.totalorder %s206, %s220
      %p222 = scmp.eq.s32.totalorder %s28, 0
      %p223 = por %p221, %p222
      %s225 = sadd.s32 %s224, 1
      %p228 = scmp.eq.s32.totalorder %s22, 1
      %p229 = scmp.ne.s32.totalorder %s224, %s226
      %p230 = scmp.eq.s32.totalorder %s22, 0
      %p231 = por %p229, %p230
      %p232 = scmp.ne.s32.totalorder %s224, %s226
      %p233 = scmp.eq.s32.totalorder %s27, 1
      %p234 = por %p232, %p233
      %p235 = scmp.ne.s32.totalorder %s226, %s227
      %p236 = scmp.eq.s32.totalorder %s27, 0
      %p237 = por %p235, %p236
      %p238 = scmp.ne.s32.totalorder %s226, %s227
      %p239 = scmp.eq.s32.totalorder %s28, 1
      %p240 = por %p238, %p239
      %p242 = scmp.ne.s32.totalorder %s227, %s241
      %p243 = scmp.eq.s32.totalorder %s28, 0
      %p244 = por %p242, %p243
      %s246 = sadd.s32 %s245, 1
      %p249 = scmp.eq.s32.totalorder %s22, 1
      %p250 = scmp.ne.s32.totalorder %s245, %s247
      %p251 = scmp.eq.s32.totalorder %s22, 0
      %p252 = por %p250, %p251
      %p253 = scmp.ne.s32.totalorder %s245, %s247
      %p254 = scmp.eq.s32.totalorder %s27, 1
      %p255 = por %p253, %p254
      %p256 = scmp.ne.s32.totalorder %s247, %s248
      %p257 = scmp.eq.s32.totalorder %s27, 0
      %p258 = por %p256, %p257
      %p259 = scmp.ne.s32.totalorder %s247, %s248
      %p260 = scmp.eq.s32.totalorder %s28, 1
      %p261 = por %p259, %p260
      %p263 = scmp.ne.s32.totalorder %s248, %s262
      %p264 = scmp.eq.s32.totalorder %s28, 0
      %p265 = por %p263, %p264
      %s267 = sadd.s32 %s266, 1
      %p270 = scmp.eq.s32.totalorder %s22, 1
      %p271 = scmp.ne.s32.totalorder %s266, %s268
      %p272 = scmp.eq.s32.totalorder %s22, 0
      %p273 = por %p271, %p272
      %p274 = scmp.ne.s32.totalorder %s266, %s268
      %p275 = scmp.eq.s32.totalorder %s27, 1
      %p276 = por %p274, %p275
      %p277 = scmp.ne.s32.totalorder %s268, %s269
      %p278 = scmp.eq.s32.totalorder %s27, 0
      %p279 = por %p277, %p278
      %p280 = scmp.ne.s32.totalorder %s268, %s269
      %p281 = scmp.eq.s32.totalorder %s28, 1
      %p282 = por %p280, %p281
      %p284 = scmp.ne.s32.totalorder %s269, %s283
      %p285 = scmp.eq.s32.totalorder %s28, 0
      %p286 = por %p284, %p285
      %s288 = sadd.s32 %s287, 1
      %p291 = scmp.eq.s32.totalorder %s22, 1
      %p292 = scmp.ne.s32.totalorder %s287, %s289
      %p293 = scmp.eq.s32.totalorder %s22, 0
      %p294 = por %p292, %p293
      %p295 = scmp.ne.s32.totalorder %s287, %s289
      %p296 = scmp.eq.s32.totalorder %s27, 1
      %p297 = por %p295, %p296
      %p298 = scmp.ne.s32.totalorder %s289, %s290
      %p299 = scmp.eq.s32.totalorder %s27, 0
      %p300 = por %p298, %p299
      %p301 = scmp.ne.s32.totalorder %s289, %s290
      %p302 = scmp.eq.s32.totalorder %s28, 1
      %p303 = por %p301, %p302
      %p305 = scmp.ne.s32.totalorder %s290, %s304
      %p306 = scmp.eq.s32.totalorder %s28, 0
      %p307 = por %p305, %p306
      %s308 = ssub.s32 %s22, %s29
      %p309 = scmp.eq.s32.totalorder %s308, 0
      %s311 = sadd.s32 %s310, 1
      %s312 = scalar_select %p309, %s310, %s311
      %p315 = pneg %p309
      %p316 = scmp.eq.s32.totalorder %s22, 1
      %p317 = por %p315, %p316
      %p318 = scmp.ne.s32.totalorder %s310, %s313
      %p319 = scmp.eq.s32.totalorder %s22, 0
      %p320 = por %p318, %p319
      %p321 = scmp.ne.s32.totalorder %s310, %s313
      %p322 = scmp.eq.s32.totalorder %s27, 1
      %p323 = por %p321, %p322
      %p324 = scmp.ne.s32.totalorder %s313, %s314
      %p325 = scmp.eq.s32.totalorder %s27, 0
      %p326 = por %p324, %p325
      %p327 = scmp.ne.s32.totalorder %s313, %s314
      %p328 = scmp.eq.s32.totalorder %s28, 1
      %p329 = por %p327, %p328
      %p331 = scmp.ne.s32.totalorder %s314, %s330
      %p332 = scmp.eq.s32.totalorder %s28, 0
      %p333 = por %p331, %p332
      %p334 = scmp.le.s32.totalorder 1, %s22
      %p335 = scmp.lt.s32.totalorder %s22, 3
      %p336 = pnand %p334, %p335
      %p337 = pneg %p336
      // Predicated region
      $region9: #{tpu_custom_call.1} parent=5 // pred_check
        _
      $region10: #{tpu_custom_call.1} parent=5 // pred_check_branch
        %339 = sbr.rel (%p336) target = $region12
      $region11: #{tpu_custom_call.1} parent=5 // pred_region
        %s340 = ssub.s32 %s22, 1
        // Predicated region
        $region13: #{tpu_custom_call.1} parent=11 // pred_check
          %p341 = pneg %p69
        $region14: #{tpu_custom_call.1} parent=11 // pred_check_branch
          %343 = sbr.rel (%p341) target = $region16
        $region15: #{tpu_custom_call.1} parent=11 // pred_region
          _
        $region16: #{tpu_custom_call.1} parent=11 // pred_fallthru
          _
        // Predicated region
        $region17: #{tpu_custom_call.1} parent=11 // pred_check
          %p344 = pneg %p90
        $region18: #{tpu_custom_call.1} parent=11 // pred_check_branch
          %346 = sbr.rel (%p344) target = $region20
        $region19: #{tpu_custom_call.1} parent=11 // pred_region
          _
        $region20: #{tpu_custom_call.1} parent=11 // pred_fallthru
          _
        // Predicated region
        $region21: #{tpu_custom_call.1} parent=11 // pred_check
          %p347 = pneg %p111
        $region22: #{tpu_custom_call.1} parent=11 // pred_check_branch
          %349 = sbr.rel (%p347) target = $region24
        $region23: #{tpu_custom_call.1} parent=11 // pred_region
          _
        $region24: #{tpu_custom_call.1} parent=11 // pred_fallthru
          _
        // Predicated region
        $region25: #{tpu_custom_call.1} parent=11 // pred_check
          %p350 = pneg %p132
        $region26: #{tpu_custom_call.1} parent=11 // pred_check_branch
          %352 = sbr.rel (%p350) target = $region28
        $region27: #{tpu_custom_call.1} parent=11 // pred_region
          _
        $region28: #{tpu_custom_call.1} parent=11 // pred_fallthru
          _
        // Predicated region
        $region29: #{tpu_custom_call.1} parent=11 // pred_check
          %p353 = pneg %p153
        $region30: #{tpu_custom_call.1} parent=11 // pred_check_branch
          %355 = sbr.rel (%p353) target = $region32
        $region31: #{tpu_custom_call.1} parent=11 // pred_region
          _
        $region32: #{tpu_custom_call.1} parent=11 // pred_fallthru
          _
        // Predicated region
        $region33: #{tpu_custom_call.1} parent=11 // pred_check
          %p356 = pneg %p174
        $region34: #{tpu_custom_call.1} parent=11 // pred_check_branch
          %358 = sbr.rel (%p356) target = $region36
        $region35: #{tpu_custom_call.1} parent=11 // pred_region
          _
        $region36: #{tpu_custom_call.1} parent=11 // pred_fallthru
          _
        // Predicated region
        $region37: #{tpu_custom_call.1} parent=11 // pred_check
          %p359 = pneg %p195
        $region38: #{tpu_custom_call.1} parent=11 // pred_check_branch
          %361 = sbr.rel (%p359) target = $region40
        $region39: #{tpu_custom_call.1} parent=11 // pred_region
          _
        $region40: #{tpu_custom_call.1} parent=11 // pred_fallthru
          _
        // Predicated region
        $region41: #{tpu_custom_call.1} parent=11 // pred_check
          %p362 = pneg %p216
        $region42: #{tpu_custom_call.1} parent=11 // pred_check_branch
          %364 = sbr.rel (%p362) target = $region44
        $region43: #{tpu_custom_call.1} parent=11 // pred_region
          _
        $region44: #{tpu_custom_call.1} parent=11 // pred_fallthru
          _
        // Predicated region
        $region45: #{tpu_custom_call.1} parent=11 // pred_check
          %p365 = pneg %p237
        $region46: #{tpu_custom_call.1} parent=11 // pred_check_branch
          %367 = sbr.rel (%p365) target = $region48
        $region47: #{tpu_custom_call.1} parent=11 // pred_region
          _
        $region48: #{tpu_custom_call.1} parent=11 // pred_fallthru
          _
        // Predicated region
        $region49: #{tpu_custom_call.1} parent=11 // pred_check
          %p368 = pneg %p258
        $region50: #{tpu_custom_call.1} parent=11 // pred_check_branch
          %370 = sbr.rel (%p368) target = $region52
        $region51: #{tpu_custom_call.1} parent=11 // pred_region
          _
        $region52: #{tpu_custom_call.1} parent=11 // pred_fallthru
          _
        // Predicated region
        $region53: #{tpu_custom_call.1} parent=11 // pred_check
          %p371 = pneg %p279
        $region54: #{tpu_custom_call.1} parent=11 // pred_check_branch
          %373 = sbr.rel (%p371) target = $region56
        $region55: #{tpu_custom_call.1} parent=11 // pred_region
          _
        $region56: #{tpu_custom_call.1} parent=11 // pred_fallthru
          _
        // Predicated region
        $region57: #{tpu_custom_call.1} parent=11 // pred_check
          %p374 = pneg %p300
        $region58: #{tpu_custom_call.1} parent=11 // pred_check_branch
          %376 = sbr.rel (%p374) target = $region60
        $region59: #{tpu_custom_call.1} parent=11 // pred_region
          _
        $region60: #{tpu_custom_call.1} parent=11 // pred_fallthru
          _
      $region12: #{tpu_custom_call.1} parent=5 // pred_fallthru
        _
      %p377 = scmp.lt.s32.totalorder %s22, 2
      // Predicated region
      $region61: #{tpu_custom_call.1} parent=5 // pred_check
        %p378 = pneg %p377
      $region62: #{tpu_custom_call.1} parent=5 // pred_check_branch
        %380 = sbr.rel (%p378) target = $region64
      $region63: #{tpu_custom_call.1} parent=5 // pred_region
        // Predicated region
        $region65: #{tpu_custom_call.1} parent=63 // pred_check
          %p381 = pneg %p42
        $region66: #{tpu_custom_call.1} parent=63 // pred_check_branch
          %383 = sbr.rel (%p381) target = $region68
        $region67: #{tpu_custom_call.1} parent=63 // pred_region
          %p384 = scmp.lt.s32.totalorder %s22, 1
          %s385 = scalar_select %p384, %s22, 1
          %s386 = smul.addr %s385, 8
          %s387 = scalar_lea.vmem %s0, %s386
        $region68: #{tpu_custom_call.1} parent=63 // pred_fallthru
          _
      $region64: #{tpu_custom_call.1} parent=5 // pred_fallthru
        _
      %p388 = scmp.le.s32.totalorder 1, %s22
      %p389 = scmp.lt.s32.totalorder %s22, 3
      %p390 = pnand %p388, %p389
      %p391 = pneg %p390
      // Predicated region
      $region69: #{tpu_custom_call.1} parent=5 // pred_check
        _
      $region70: #{tpu_custom_call.1} parent=5 // pred_check_branch
        %393 = sbr.rel (%p390) target = $region72
      $region71: #{tpu_custom_call.1} parent=5 // pred_region
        %s394 = ssub.s32 %s22, 1
        %p395 = scmp.lt.s32.totalorder %s27, 1
        %s396 = scalar_select %p395, %s27, 1
        %s397 = smul.addr %s396, 8
        %s398 = scalar_lea.vmem %s0, %s397
        %p399 = pneg %p48
        %p400 = pneg %p45
        %p401 = pneg %p69
        %p402 = pneg %p66
        %p403 = pneg %p90
        %p404 = pneg %p87
        %p405 = pneg %p111
        %p406 = pneg %p108
        %p407 = pneg %p132
        %p408 = pneg %p129
        %p409 = pneg %p153
        %p410 = pneg %p150
        %p411 = pneg %p174
        %p412 = pneg %p171
        %p413 = pneg %p195
        %p414 = pneg %p192
        %p415 = pneg %p216
        %p416 = pneg %p213
        %p417 = pneg %p237
        %p418 = pneg %p234
        %p419 = pneg %p258
        %p420 = pneg %p255
        %p421 = pneg %p279
        %p422 = pneg %p276
        %p423 = pneg %p300
        %p424 = pneg %p297
        %p425 = pneg %p326
        %p426 = pneg %p323
        %s427 = sand.u32 %s313, 1
        %s428 = scalar_lea.sflag [#allocation4], %s427
        %s429 = sand.u32 %s313, 1
        %s430 = smul.addr %s429, 8
        %s431 = scalar_lea.vmem [#allocation3], %s430
        %p432 = scmp.lt.s32.totalorder %s27, 1
        %s433 = scalar_select %p432, %s27, 1
        %s434 = smul.addr %s433, 8
        %s435 = scalar_lea.vmem %s0, %s434
        $region73: #{tpu_custom_call.1} parent=71
          #allocation5 [shape = 'u8[8192]{0}', space=vmem, size = 0x2000, scoped, tag = 'scoped memory for tpu_custom_call.1']
          #allocation6 [shape = 'u8[8192]{0}', space=vmem, size = 0x2000, scoped, tag = 'scoped memory for tpu_custom_call.1']
          #allocation7 [shape = 'u8[8192]{0}', space=vmem, size = 0x2000, scoped, tag = 'scoped memory for tpu_custom_call.1']
          %v437 = vld [vmem:[%s435] sm:$0xff]
          %v438 = vld [vmem:[%s1] sm:$0x1]
          %v439 = vld [vmem:[%s2] sm:$0x1]
          %vm440 = vcmask 261120
          %v441 = vsel %vm440, %v437, 0.0
          %442 = vadd.xlane.f32.xlu0 %v441
          %v443 = vpop.xlane.xlu0 %442
          %v444 = vrcp.pop 32.0
          %v445 = vmul.f32 %v443, %v444
          %v446 = vsub.f32 %v437, %v445
          %v447 = vmul.f32 %v446, %v446
          %v448 = vsel %vm440, %v447, 0.0
          %449 = vadd.xlane.f32.xlu0 %v448
          %v450 = vpop.xlane.xlu0 %449
          %v451 = vmul.f32 %v450, %v444
          %v452 = vadd.f32 %v451, 1e-05
          %v453 = vrsqrt.pop %v452
          %v454 = vmul.f32 %v446, %v453
          %v456 = vlaneseq
          %v457 = vshrl.u32 %v456, 7
          %v458 = vsub.s32 0, %v457
          %v459 = vrot.slane %v438, %v458
          %v461 = vmul.f32 %v454, %v459
          %v463 = vlaneseq
          %v464 = vshrl.u32 %v463, 7
          %v465 = vsub.s32 0, %v464
          %v466 = vrot.slane %v439, %v465
          %v468 = vadd.f32 %v461, %v466
          %v469 = vld [vmem:[%s3] sm:$0xf]
          %v470 = vld [vmem:[%s3 + $0x4] sm:$0xf]
          %v471 = vld [vmem:[%s3 + $0x8] sm:$0xf]
          %v472 = vld [vmem:[%s3 + $0xc] sm:$0xf]
          %v473 = vld [vmem:[%s3 + $0x10] sm:$0xf]
          %v474 = vld [vmem:[%s3 + $0x14] sm:$0xf]
          %v475 = vld [vmem:[%s3 + $0x18] sm:$0xf]
          %v476 = vld [vmem:[%s3 + $0x1c] sm:$0xf]
          %v477 = vld [vmem:[%s3 + $0x20] sm:$0xf]
          %v478 = vld [vmem:[%s3 + $0x24] sm:$0xf]
          %v479 = vld [vmem:[%s3 + $0x28] sm:$0xf]
          %v480 = vld [vmem:[%s3 + $0x2c] sm:$0xf]
          %481 = vxpose.xlu0.b32.start [1/16] %v468, 128
          %482 = vxpose.xlu0.b32.cont [2/16] 0.0, 128
          %483 = vxpose.xlu0.b32.cont [3/16] 0.0, 128
          %484 = vxpose.xlu0.b32.cont [4/16] 0.0, 128
          %485 = vxpose.xlu0.b32.cont [5/16] 0.0, 128
          %486 = vxpose.xlu0.b32.cont [6/16] 0.0, 128
          %487 = vxpose.xlu0.b32.cont [7/16] 0.0, 128
          %488 = vxpose.xlu0.b32.cont [8/16] 0.0, 128
          %489 = vxpose.xlu0.b32.cont [9/16] 0.0, 128
          %490 = vxpose.xlu0.b32.cont [10/16] 0.0, 128
          %491 = vxpose.xlu0.b32.cont [11/16] 0.0, 128
          %492 = vxpose.xlu0.b32.cont [12/16] 0.0, 128
          %493 = vxpose.xlu0.b32.cont [13/16] 0.0, 128
          %494 = vxpose.xlu0.b32.cont [14/16] 0.0, 128
          %495 = vxpose.xlu0.b32.cont [15/16] 0.0, 128
          %496 = vxpose.xlu0.b32.end [16/16] 0.0, 128
          %v497 = vpop.trf.xlu0
          %v498 = vpop.trf.xlu0
          %v499 = vpop.trf.xlu0
          %v500 = vpop.trf.xlu0
          %v501 = vpop.trf.xlu0
          %v502 = vpop.trf.xlu0
          %v503 = vpop.trf.xlu0
          %v504 = vpop.trf.xlu0
          %v505 = vpop.trf.xlu0
          %v506 = vpop.trf.xlu0
          %v507 = vpop.trf.xlu0
          %v508 = vpop.trf.xlu0
          %v509 = vpop.trf.xlu0
          %v510 = vpop.trf.xlu0
          %v511 = vpop.trf.xlu0
          %v512 = vpop.trf.xlu0
          %v513 = vpack.c.bf16 %v498, %v497
          %v514 = vpack.c.bf16 %v500, %v499
          %v515 = vld [vmem:[%s4] sm:$0xff]
          %v516 = vld [vmem:[%s4 + $0x8] sm:$0xff]
          %v517 = vld [vmem:[%s4 + $0x10] sm:$0xff]
          %v518 = vld [vmem:[%s4 + $0x18] sm:$0xff]
          %v519 = vld [vmem:[%s4 + $0x20] sm:$0xff]
          %v520 = vld [vmem:[%s4 + $0x28] sm:$0xff]
          %v521 = vld [vmem:[%s4 + $0x30] sm:$0xff]
          %v522 = vld [vmem:[%s4 + $0x38] sm:$0xff]
          %v523 = vld [vmem:[%s4 + $0x40] sm:$0xff]
          %v524 = vld [vmem:[%s4 + $0x48] sm:$0xff]
          %v525 = vld [vmem:[%s4 + $0x50] sm:$0xff]
          %v526 = vld [vmem:[%s4 + $0x58] sm:$0xff]
          %528 = vset.pattern.permute.xlu0 0
          %529 = vperm.xlu0 %528, %v515
          %v530 = vpop.permute.xlu0 %529
          %533 = vset.pattern.permute.xlu0 0
          %534 = vperm.xlu0 %533, %v516
          %v535 = vpop.permute.xlu0 %534
          %538 = vset.pattern.permute.xlu0 0
          %539 = vperm.xlu0 %538, %v517
          %v540 = vpop.permute.xlu0 %539
          %543 = vset.pattern.permute.xlu0 0
          %544 = vperm.xlu0 %543, %v518
          %v545 = vpop.permute.xlu0 %544
          %548 = vset.pattern.permute.xlu0 0
          %549 = vperm.xlu0 %548, %v519
          %v550 = vpop.permute.xlu0 %549
          %553 = vset.pattern.permute.xlu0 0
          %554 = vperm.xlu0 %553, %v520
          %v555 = vpop.permute.xlu0 %554
          %558 = vset.pattern.permute.xlu0 0
          %559 = vperm.xlu0 %558, %v521
          %v560 = vpop.permute.xlu0 %559
          %563 = vset.pattern.permute.xlu0 0
          %564 = vperm.xlu0 %563, %v522
          %v565 = vpop.permute.xlu0 %564
          %568 = vset.pattern.permute.xlu0 0
          %569 = vperm.xlu0 %568, %v523
          %v570 = vpop.permute.xlu0 %569
          %573 = vset.pattern.permute.xlu0 0
          %574 = vperm.xlu0 %573, %v524
          %v575 = vpop.permute.xlu0 %574
          %578 = vset.pattern.permute.xlu0 0
          %579 = vperm.xlu0 %578, %v525
          %v580 = vpop.permute.xlu0 %579
          %583 = vset.pattern.permute.xlu0 0
          %584 = vperm.xlu0 %583, %v526
          %v585 = vpop.permute.xlu0 %584
          %v599 = vunpack.c.l.b16 %v469
          %v600 = vunpack.c.l.b16 %v470
          %v601 = vunpack.c.l.b16 %v471
          %v602 = vunpack.c.l.b16 %v472
          %v603 = vunpack.c.l.b16 %v473
          %v604 = vunpack.c.l.b16 %v474
          %v605 = vunpack.c.l.b16 %v475
          %v606 = vunpack.c.l.b16 %v476
          %v607 = vunpack.c.l.b16 %v477
          %v608 = vunpack.c.l.b16 %v478
          %v609 = vunpack.c.l.b16 %v479
          %v610 = vunpack.c.l.b16 %v480
          %v611 = vpack.c.b16 %v600, %v599
          %v612 = vpack.c.b16 %v602, %v601
          %v613 = vpack.c.b16 %v604, %v603
          %v614 = vpack.c.b16 %v606, %v605
          %v615 = vpack.c.b16 %v608, %v607
          %v616 = vpack.c.b16 %v610, %v609
          %v618 = vsel %vm440, %v611, 0
          %v621 = vsel %vm440, %v612, 0
          %v624 = vsel %vm440, %v613, 0
          %v627 = vsel %vm440, %v614, 0
          %v630 = vsel %vm440, %v615, 0
          %v633 = vsel %vm440, %v616, 0
          %635 = vmatprep.subr.bf16.mxu0 0
          %636 = vmatpush1.bf16.msra.mxu0 0
          %637 = vmatprep.subr.bf16.mxu0 0
          %638 = vmatpush1.bf16.msra.mxu0 0
          %639 = vmatprep.subr.bf16.mxu0 0
          %640 = vmatpush1.bf16.msra.mxu0 0
          %641 = vmatprep.subr.bf16.mxu0 0
          %642 = vmatpush1.bf16.msra.mxu0 0
          %643 = vmatprep.subr.bf16.mxu0 0
          %644 = vmatpush1.bf16.msra.mxu0 0
          %645 = vmatprep.subr.bf16.mxu0 0
          %646 = vmatpush1.bf16.msra.mxu0 0
          %647 = vmatprep.subr.bf16.mxu0 0
          %648 = vmatpush1.bf16.msra.mxu0 %v514
          %649 = vmatprep.subr.bf16.mxu0 0
          %650 = vmatpush1.bf16.msra.mxu0 %v513
          %651 = vmatprep.subr.bf16.mxu0 0
          %652 = vmatpush2.bf16.msra.mxu0 0
          %653 = vmatprep.subr.bf16.mxu0 0
          %654 = vmatpush2.bf16.msra.mxu0 0
          %655 = vmatprep.subr.bf16.mxu0 0
          %656 = vmatpush2.bf16.msra.mxu0 0
          %657 = vmatprep.subr.bf16.mxu0 0
          %658 = vmatpush2.bf16.msra.mxu0 0
          %659 = vmatprep.subr.bf16.mxu0 0
          %660 = vmatpush2.bf16.msra.mxu0 0
          %661 = vmatprep.subr.bf16.mxu0 0
          %662 = vmatpush2.bf16.msra.mxu0 0
          %663 = vmatprep.subr.bf16.mxu0 0
          %664 = vmatpush2.bf16.msra.mxu0 0
          %665 = vmatprep.subr.bf16.mxu0 0
          %666 = vmatpush2.bf16.msra.mxu0 0
          %667 = vmatprep.mubr.bf16.mxu0 0
          %668 = vmatmul.mubr.bf16.gmra.mxu0 %v618
          %v669 = vpop.f32.mrf.mxu0
          %v670 = vadd.f32 %v530, %v669
          %v671 = vpop.f32.mrf.mxu0
          %v672 = vpop.f32.mrf.mxu0
          %v673 = vadd.f32 %v535, %v672
          %v674 = vpop.f32.mrf.mxu0
          %675 = vmatprep.mubr.bf16.mxu0 0
          %676 = vmatmul.mubr.bf16.gmra.mxu0 %v621
          %v677 = vpop.f32.mrf.mxu0
          %v678 = vadd.f32 %v540, %v677
          %v679 = vpop.f32.mrf.mxu0
          %v680 = vpop.f32.mrf.mxu0
          %v681 = vadd.f32 %v545, %v680
          %v682 = vpop.f32.mrf.mxu0
          %683 = vmatprep.mubr.bf16.mxu0 0
          %684 = vmatmul.mubr.bf16.gmra.mxu0 %v624
          %v685 = vpop.f32.mrf.mxu0
          %v686 = vadd.f32 %v550, %v685
          %v687 = vpop.f32.mrf.mxu0
          %v688 = vpop.f32.mrf.mxu0
          %v689 = vadd.f32 %v555, %v688
          %v690 = vpop.f32.mrf.mxu0
          %691 = vmatprep.mubr.bf16.mxu0 0
          %692 = vmatmul.mubr.bf16.gmra.mxu0 %v627
          %v693 = vpop.f32.mrf.mxu0
          %v694 = vadd.f32 %v560, %v693
          %v695 = vpop.f32.mrf.mxu0
          %v696 = vpop.f32.mrf.mxu0
          %v697 = vadd.f32 %v565, %v696
          %v698 = vpop.f32.mrf.mxu0
          %699 = vmatprep.mubr.bf16.mxu0 0
          %700 = vmatmul.mubr.bf16.gmra.mxu0 %v630
          %v701 = vpop.f32.mrf.mxu0
          %v702 = vadd.f32 %v570, %v701
          %v703 = vpop.f32.mrf.mxu0
          %v704 = vpop.f32.mrf.mxu0
          %v705 = vadd.f32 %v575, %v704
          %v706 = vpop.f32.mrf.mxu0
          %707 = vmatprep.mubr.bf16.mxu0 0
          %708 = vmatmul.mubr.bf16.gmra.mxu0 %v633
          %v709 = vpop.f32.mrf.mxu0
          %v710 = vadd.f32 %v580, %v709
          %v711 = vpop.f32.mrf.mxu0
          %v712 = vpop.f32.mrf.mxu0
          %v713 = vadd.f32 %v585, %v712
          %v714 = vpop.f32.mrf.mxu0
          %715 = vdwg.mxu0
          %716 = vxpose.xlu0.b32.start [1/16] %v670, 128
          %717 = vxpose.xlu0.b32.cont [2/16] 0.0, 128
          %718 = vxpose.xlu0.b32.cont [3/16] 0.0, 128
          %719 = vxpose.xlu0.b32.cont [4/16] 0.0, 128
          %720 = vxpose.xlu0.b32.cont [5/16] 0.0, 128
          %721 = vxpose.xlu0.b32.cont [6/16] 0.0, 128
          %722 = vxpose.xlu0.b32.cont [7/16] 0.0, 128
          %723 = vxpose.xlu0.b32.cont [8/16] 0.0, 128
          %724 = vxpose.xlu0.b32.cont [9/16] 0.0, 128
          %725 = vxpose.xlu0.b32.cont [10/16] 0.0, 128
          %726 = vxpose.xlu0.b32.cont [11/16] 0.0, 128
          %727 = vxpose.xlu0.b32.cont [12/16] 0.0, 128
          %728 = vxpose.xlu0.b32.cont [13/16] 0.0, 128
          %729 = vxpose.xlu0.b32.cont [14/16] 0.0, 128
          %730 = vxpose.xlu0.b32.cont [15/16] 0.0, 128
          %731 = vxpose.xlu0.b32.end [16/16] 0.0, 128
          %v732 = vpop.trf.xlu0
          %v733 = vpop.trf.xlu0
          %v734 = vpop.trf.xlu0
          %v735 = vpop.trf.xlu0
          %v736 = vpop.trf.xlu0
          %v737 = vpop.trf.xlu0
          %v738 = vpop.trf.xlu0
          %v739 = vpop.trf.xlu0
          %v740 = vpop.trf.xlu0
          %v741 = vpop.trf.xlu0
          %v742 = vpop.trf.xlu0
          %v743 = vpop.trf.xlu0
          %v744 = vpop.trf.xlu0
          %v745 = vpop.trf.xlu0
          %v746 = vpop.trf.xlu0
          %v747 = vpop.trf.xlu0
          %v748 = vpack.c.bf16 %v732, %v732
          %vm749 = vcmask 60416
          %750 = vst.msk [vmem:[#allocation5] sm:$0xf] %vm749, %v748
          %751 = vxpose.xlu0.b32.start [1/16] %v686, 128
          %752 = vxpose.xlu0.b32.cont [2/16] 0.0, 128
          %753 = vxpose.xlu0.b32.cont [3/16] 0.0, 128
          %754 = vxpose.xlu0.b32.cont [4/16] 0.0, 128
          %755 = vxpose.xlu0.b32.cont [5/16] 0.0, 128
          %756 = vxpose.xlu0.b32.cont [6/16] 0.0, 128
          %757 = vxpose.xlu0.b32.cont [7/16] 0.0, 128
          %758 = vxpose.xlu0.b32.cont [8/16] 0.0, 128
          %759 = vxpose.xlu0.b32.cont [9/16] 0.0, 128
          %760 = vxpose.xlu0.b32.cont [10/16] 0.0, 128
          %761 = vxpose.xlu0.b32.cont [11/16] 0.0, 128
          %762 = vxpose.xlu0.b32.cont [12/16] 0.0, 128
          %763 = vxpose.xlu0.b32.cont [13/16] 0.0, 128
          %764 = vxpose.xlu0.b32.cont [14/16] 0.0, 128
          %765 = vxpose.xlu0.b32.cont [15/16] 0.0, 128
          %766 = vxpose.xlu0.b32.end [16/16] 0.0, 128
          %v767 = vpop.trf.xlu0
          %v768 = vpop.trf.xlu0
          %v769 = vpop.trf.xlu0
          %v770 = vpop.trf.xlu0
          %v771 = vpop.trf.xlu0
          %v772 = vpop.trf.xlu0
          %v773 = vpop.trf.xlu0
          %v774 = vpop.trf.xlu0
          %v775 = vpop.trf.xlu0
          %v776 = vpop.trf.xlu0
          %v777 = vpop.trf.xlu0
          %v778 = vpop.trf.xlu0
          %v779 = vpop.trf.xlu0
          %v780 = vpop.trf.xlu0
          %v781 = vpop.trf.xlu0
          %v782 = vpop.trf.xlu0
          %v783 = vpack.c.bf16 %v767, %v767
          %784 = vst.msk [vmem:[#allocation6] sm:$0xf] %vm749, %v783
          %785 = vxpose.xlu0.b32.start [1/16] %v702, 128
          %786 = vxpose.xlu0.b32.cont [2/16] 0.0, 128
          %787 = vxpose.xlu0.b32.cont [3/16] 0.0, 128
          %788 = vxpose.xlu0.b32.cont [4/16] 0.0, 128
          %789 = vxpose.xlu0.b32.cont [5/16] 0.0, 128
          %790 = vxpose.xlu0.b32.cont [6/16] 0.0, 128
          %791 = vxpose.xlu0.b32.cont [7/16] 0.0, 128
          %792 = vxpose.xlu0.b32.cont [8/16] 0.0, 128
          %793 = vxpose.xlu0.b32.cont [9/16] 0.0, 128
          %794 = vxpose.xlu0.b32.cont [10/16] 0.0, 128
          %795 = vxpose.xlu0.b32.cont [11/16] 0.0, 128
          %796 = vxpose.xlu0.b32.cont [12/16] 0.0, 128
          %797 = vxpose.xlu0.b32.cont [13/16] 0.0, 128
          %798 = vxpose.xlu0.b32.cont [14/16] 0.0, 128
          %799 = vxpose.xlu0.b32.cont [15/16] 0.0, 128
          %800 = vxpose.xlu0.b32.end [16/16] 0.0, 128
          %v801 = vpop.trf.xlu0
          %v802 = vpop.trf.xlu0
          %v803 = vpop.trf.xlu0
          %v804 = vpop.trf.xlu0
          %v805 = vpop.trf.xlu0
          %v806 = vpop.trf.xlu0
          %v807 = vpop.trf.xlu0
          %v808 = vpop.trf.xlu0
          %v809 = vpop.trf.xlu0
          %v810 = vpop.trf.xlu0
          %v811 = vpop.trf.xlu0
          %v812 = vpop.trf.xlu0
          %v813 = vpop.trf.xlu0
          %v814 = vpop.trf.xlu0
          %v815 = vpop.trf.xlu0
          %v816 = vpop.trf.xlu0
          %v817 = vpack.c.bf16 %v801, %v801
          %818 = vst.msk [vmem:[#allocation7] sm:$0xf] %vm749, %v817
          %819 = vxpose.xlu0.b32.start [1/16] %v673, 128
          %820 = vxpose.xlu0.b32.cont [2/16] 0.0, 128
          %821 = vxpose.xlu0.b32.cont [3/16] 0.0, 128
          %822 = vxpose.xlu0.b32.cont [4/16] 0.0, 128
          %823 = vxpose.xlu0.b32.cont [5/16] 0.0, 128
          %824 = vxpose.xlu0.b32.cont [6/16] 0.0, 128
          %825 = vxpose.xlu0.b32.cont [7/16] 0.0, 128
          %826 = vxpose.xlu0.b32.cont [8/16] 0.0, 128
          %827 = vxpose.xlu0.b32.cont [9/16] 0.0, 128
          %828 = vxpose.xlu0.b32.cont [10/16] 0.0, 128
          %829 = vxpose.xlu0.b32.cont [11/16] 0.0, 128
          %830 = vxpose.xlu0.b32.cont [12/16] 0.0, 128
          %831 = vxpose.xlu0.b32.cont [13/16] 0.0, 128
          %832 = vxpose.xlu0.b32.cont [14/16] 0.0, 128
          %833 = vxpose.xlu0.b32.cont [15/16] 0.0, 128
          %834 = vxpose.xlu0.b32.end [16/16] 0.0, 128
          %v835 = vpop.trf.xlu0
          %v836 = vpop.trf.xlu0
          %v837 = vpop.trf.xlu0
          %v838 = vpop.trf.xlu0
          %v839 = vpop.trf.xlu0
          %v840 = vpop.trf.xlu0
          %v841 = vpop.trf.xlu0
          %v842 = vpop.trf.xlu0
          %v843 = vpop.trf.xlu0
          %v844 = vpop.trf.xlu0
          %v845 = vpop.trf.xlu0
          %v846 = vpop.trf.xlu0
          %v847 = vpop.trf.xlu0
          %v848 = vpop.trf.xlu0
          %v849 = vpop.trf.xlu0
          %v850 = vpop.trf.xlu0
          %v851 = vpack.c.bf16 %v835, %v835
          %s852 = scalar_lea.vmem [#allocation5], 4
          %853 = vst.msk [vmem:[%s852] sm:$0xf] %vm749, %v851
          %854 = vxpose.xlu0.b32.start [1/16] %v689, 128
          %855 = vxpose.xlu0.b32.cont [2/16] 0.0, 128
          %856 = vxpose.xlu0.b32.cont [3/16] 0.0, 128
          %857 = vxpose.xlu0.b32.cont [4/16] 0.0, 128
          %858 = vxpose.xlu0.b32.cont [5/16] 0.0, 128
          %859 = vxpose.xlu0.b32.cont [6/16] 0.0, 128
          %860 = vxpose.xlu0.b32.cont [7/16] 0.0, 128
          %861 = vxpose.xlu0.b32.cont [8/16] 0.0, 128
          %862 = vxpose.xlu0.b32.cont [9/16] 0.0, 128
          %863 = vxpose.xlu0.b32.cont [10/16] 0.0, 128
          %864 = vxpose.xlu0.b32.cont [11/16] 0.0, 128
          %865 = vxpose.xlu0.b32.cont [12/16] 0.0, 128
          %866 = vxpose.xlu0.b32.cont [13/16] 0.0, 128
          %867 = vxpose.xlu0.b32.cont [14/16] 0.0, 128
          %868 = vxpose.xlu0.b32.cont [15/16] 0.0, 128
          %869 = vxpose.xlu0.b32.end [16/16] 0.0, 128
          %v870 = vpop.trf.xlu0
          %v871 = vpop.trf.xlu0
          %v872 = vpop.trf.xlu0
          %v873 = vpop.trf.xlu0
          %v874 = vpop.trf.xlu0
          %v875 = vpop.trf.xlu0
          %v876 = vpop.trf.xlu0
          %v877 = vpop.trf.xlu0
          %v878 = vpop.trf.xlu0
          %v879 = vpop.trf.xlu0
          %v880 = vpop.trf.xlu0
          %v881 = vpop.trf.xlu0
          %v882 = vpop.trf.xlu0
          %v883 = vpop.trf.xlu0
          %v884 = vpop.trf.xlu0
          %v885 = vpop.trf.xlu0
          %v886 = vpack.c.bf16 %v870, %v870
          %s887 = scalar_lea.vmem [#allocation6], 4
          %888 = vst.msk [vmem:[%s887] sm:$0xf] %vm749, %v886
          %889 = vxpose.xlu0.b32.start [1/16] %v705, 128
          %890 = vxpose.xlu0.b32.cont [2/16] 0.0, 128
          %891 = vxpose.xlu0.b32.cont [3/16] 0.0, 128
          %892 = vxpose.xlu0.b32.cont [4/16] 0.0, 128
          %893 = vxpose.xlu0.b32.cont [5/16] 0.0, 128
          %894 = vxpose.xlu0.b32.cont [6/16] 0.0, 128
          %895 = vxpose.xlu0.b32.cont [7/16] 0.0, 128
          %896 = vxpose.xlu0.b32.cont [8/16] 0.0, 128
          %897 = vxpose.xlu0.b32.cont [9/16] 0.0, 128
          %898 = vxpose.xlu0.b32.cont [10/16] 0.0, 128
          %899 = vxpose.xlu0.b32.cont [11/16] 0.0, 128
          %900 = vxpose.xlu0.b32.cont [12/16] 0.0, 128
          %901 = vxpose.xlu0.b32.cont [13/16] 0.0, 128
          %902 = vxpose.xlu0.b32.cont [14/16] 0.0, 128
          %903 = vxpose.xlu0.b32.cont [15/16] 0.0, 128
          %904 = vxpose.xlu0.b32.end [16/16] 0.0, 128
          %v905 = vpop.trf.xlu0
          %v906 = vpop.trf.xlu0
          %v907 = vpop.trf.xlu0
          %v908 = vpop.trf.xlu0
          %v909 = vpop.trf.xlu0
          %v910 = vpop.trf.xlu0
          %v911 = vpop.trf.xlu0
          %v912 = vpop.trf.xlu0
          %v913 = vpop.trf.xlu0
          %v914 = vpop.trf.xlu0
          %v915 = vpop.trf.xlu0
          %v916 = vpop.trf.xlu0
          %v917 = vpop.trf.xlu0
          %v918 = vpop.trf.xlu0
          %v919 = vpop.trf.xlu0
          %v920 = vpop.trf.xlu0
          %v921 = vpack.c.bf16 %v905, %v905
          %s922 = scalar_lea.vmem [#allocation7], 4
          %923 = vst.msk [vmem:[%s922] sm:$0xf] %vm749, %v921
          %924 = vxpose.xlu0.b32.start [1/16] %v678, 128
          %925 = vxpose.xlu0.b32.cont [2/16] 0.0, 128
          %926 = vxpose.xlu0.b32.cont [3/16] 0.0, 128
          %927 = vxpose.xlu0.b32.cont [4/16] 0.0, 128
          %928 = vxpose.xlu0.b32.cont [5/16] 0.0, 128
          %929 = vxpose.xlu0.b32.cont [6/16] 0.0, 128
          %930 = vxpose.xlu0.b32.cont [7/16] 0.0, 128
          %931 = vxpose.xlu0.b32.cont [8/16] 0.0, 128
          %932 = vxpose.xlu0.b32.cont [9/16] 0.0, 128
          %933 = vxpose.xlu0.b32.cont [10/16] 0.0, 128
          %934 = vxpose.xlu0.b32.cont [11/16] 0.0, 128
          %935 = vxpose.xlu0.b32.cont [12/16] 0.0, 128
          %936 = vxpose.xlu0.b32.cont [13/16] 0.0, 128
          %937 = vxpose.xlu0.b32.cont [14/16] 0.0, 128
          %938 = vxpose.xlu0.b32.cont [15/16] 0.0, 128
          %939 = vxpose.xlu0.b32.end [16/16] 0.0, 128
          %v940 = vpop.trf.xlu0
          %v941 = vpop.trf.xlu0
          %v942 = vpop.trf.xlu0
          %v943 = vpop.trf.xlu0
          %v944 = vpop.trf.xlu0
          %v945 = vpop.trf.xlu0
          %v946 = vpop.trf.xlu0
          %v947 = vpop.trf.xlu0
          %v948 = vpop.trf.xlu0
          %v949 = vpop.trf.xlu0
          %v950 = vpop.trf.xlu0
          %v951 = vpop.trf.xlu0
          %v952 = vpop.trf.xlu0
          %v953 = vpop.trf.xlu0
          %v954 = vpop.trf.xlu0
          %v955 = vpop.trf.xlu0
          %v956 = vpack.c.bf16 %v940, %v940
          %s957 = scalar_lea.vmem [#allocation5], 8
          %958 = vst.msk [vmem:[%s957] sm:$0xf] %vm749, %v956
          %959 = vxpose.xlu0.b32.start [1/16] %v694, 128
          %960 = vxpose.xlu0.b32.cont [2/16] 0.0, 128
          %961 = vxpose.xlu0.b32.cont [3/16] 0.0, 128
          %962 = vxpose.xlu0.b32.cont [4/16] 0.0, 128
          %963 = vxpose.xlu0.b32.cont [5/16] 0.0, 128
          %964 = vxpose.xlu0.b32.cont [6/16] 0.0, 128
          %965 = vxpose.xlu0.b32.cont [7/16] 0.0, 128
          %966 = vxpose.xlu0.b32.cont [8/16] 0.0, 128
          %967 = vxpose.xlu0.b32.cont [9/16] 0.0, 128
          %968 = vxpose.xlu0.b32.cont [10/16] 0.0, 128
          %969 = vxpose.xlu0.b32.cont [11/16] 0.0, 128
          %970 = vxpose.xlu0.b32.cont [12/16] 0.0, 128
          %971 = vxpose.xlu0.b32.cont [13/16] 0.0, 128
          %972 = vxpose.xlu0.b32.cont [14/16] 0.0, 128
          %973 = vxpose.xlu0.b32.cont [15/16] 0.0, 128
          %974 = vxpose.xlu0.b32.end [16/16] 0.0, 128
          %v975 = vpop.trf.xlu0
          %v976 = vpop.trf.xlu0
          %v977 = vpop.trf.xlu0
          %v978 = vpop.trf.xlu0
          %v979 = vpop.trf.xlu0
          %v980 = vpop.trf.xlu0
          %v981 = vpop.trf.xlu0
          %v982 = vpop.trf.xlu0
          %v983 = vpop.trf.xlu0
          %v984 = vpop.trf.xlu0
          %v985 = vpop.trf.xlu0
          %v986 = vpop.trf.xlu0
          %v987 = vpop.trf.xlu0
          %v988 = vpop.trf.xlu0
          %v989 = vpop.trf.xlu0
          %v990 = vpop.trf.xlu0
          %v991 = vpack.c.bf16 %v975, %v975
          %s992 = scalar_lea.vmem [#allocation6], 8
          %993 = vst.msk [vmem:[%s992] sm:$0xf] %vm749, %v991
          %994 = vxpose.xlu0.b32.start [1/16] %v710, 128
          %995 = vxpose.xlu0.b32.cont [2/16] 0.0, 128
          %996 = vxpose.xlu0.b32.cont [3/16] 0.0, 128
          %997 = vxpose.xlu0.b32.cont [4/16] 0.0, 128
          %998 = vxpose.xlu0.b32.cont [5/16] 0.0, 128
          %999 = vxpose.xlu0.b32.cont [6/16] 0.0, 128
          %1000 = vxpose.xlu0.b32.cont [7/16] 0.0, 128
          %1001 = vxpose.xlu0.b32.cont [8/16] 0.0, 128
          %1002 = vxpose.xlu0.b32.cont [9/16] 0.0, 128
          %1003 = vxpose.xlu0.b32.cont [10/16] 0.0, 128
          %1004 = vxpose.xlu0.b32.cont [11/16] 0.0, 128
          %1005 = vxpose.xlu0.b32.cont [12/16] 0.0, 128
          %1006 = vxpose.xlu0.b32.cont [13/16] 0.0, 128
          %1007 = vxpose.xlu0.b32.cont [14/16] 0.0, 128
          %1008 = vxpose.xlu0.b32.cont [15/16] 0.0, 128
          %1009 = vxpose.xlu0.b32.end [16/16] 0.0, 128
          %v1010 = vpop.trf.xlu0
          %v1011 = vpop.trf.xlu0
          %v1012 = vpop.trf.xlu0
          %v1013 = vpop.trf.xlu0
          %v1014 = vpop.trf.xlu0
          %v1015 = vpop.trf.xlu0
          %v1016 = vpop.trf.xlu0
          %v1017 = vpop.trf.xlu0
          %v1018 = vpop.trf.xlu0
          %v1019 = vpop.trf.xlu0
          %v1020 = vpop.trf.xlu0
          %v1021 = vpop.trf.xlu0
          %v1022 = vpop.trf.xlu0
          %v1023 = vpop.trf.xlu0
          %v1024 = vpop.trf.xlu0
          %v1025 = vpop.trf.xlu0
          %v1026 = vpack.c.bf16 %v1010, %v1010
          %s1027 = scalar_lea.vmem [#allocation7], 8
          %1028 = vst.msk [vmem:[%s1027] sm:$0xf] %vm749, %v1026
          %1029 = vxpose.xlu0.b32.start [1/16] %v681, 128
          %1030 = vxpose.xlu0.b32.cont [2/16] 0.0, 128
          %1031 = vxpose.xlu0.b32.cont [3/16] 0.0, 128
          %1032 = vxpose.xlu0.b32.cont [4/16] 0.0, 128
          %1033 = vxpose.xlu0.b32.cont [5/16] 0.0, 128
          %1034 = vxpose.xlu0.b32.cont [6/16] 0.0, 128
          %1035 = vxpose.xlu0.b32.cont [7/16] 0.0, 128
          %1036 = vxpose.xlu0.b32.cont [8/16] 0.0, 128
          %1037 = vxpose.xlu0.b32.cont [9/16] 0.0, 128
          %1038 = vxpose.xlu0.b32.cont [10/16] 0.0, 128
          %1039 = vxpose.xlu0.b32.cont [11/16] 0.0, 128
          %1040 = vxpose.xlu0.b32.cont [12/16] 0.0, 128
          %1041 = vxpose.xlu0.b32.cont [13/16] 0.0, 128
          %1042 = vxpose.xlu0.b32.cont [14/16] 0.0, 128
          %1043 = vxpose.xlu0.b32.cont [15/16] 0.0, 128
          %1044 = vxpose.xlu0.b32.end [16/16] 0.0, 128
          %v1045 = vpop.trf.xlu0
          %v1046 = vpop.trf.xlu0
          %v1047 = vpop.trf.xlu0
          %v1048 = vpop.trf.xlu0
          %v1049 = vpop.trf.xlu0
          %v1050 = vpop.trf.xlu0
          %v1051 = vpop.trf.xlu0
          %v1052 = vpop.trf.xlu0
          %v1053 = vpop.trf.xlu0
          %v1054 = vpop.trf.xlu0
          %v1055 = vpop.trf.xlu0
          %v1056 = vpop.trf.xlu0
          %v1057 = vpop.trf.xlu0
          %v1058 = vpop.trf.xlu0
          %v1059 = vpop.trf.xlu0
          %v1060 = vpop.trf.xlu0
          %v1061 = vpack.c.bf16 %v1045, %v1045
          %s1062 = scalar_lea.vmem [#allocation5], 12
          %1063 = vst.msk [vmem:[%s1062] sm:$0xf] %vm749, %v1061
          %1064 = vxpose.xlu0.b32.start [1/16] %v697, 128
          %1065 = vxpose.xlu0.b32.cont [2/16] 0.0, 128
          %1066 = vxpose.xlu0.b32.cont [3/16] 0.0, 128
          %1067 = vxpose.xlu0.b32.cont [4/16] 0.0, 128
          %1068 = vxpose.xlu0.b32.cont [5/16] 0.0, 128
          %1069 = vxpose.xlu0.b32.cont [6/16] 0.0, 128
          %1070 = vxpose.xlu0.b32.cont [7/16] 0.0, 128
          %1071 = vxpose.xlu0.b32.cont [8/16] 0.0, 128
          %1072 = vxpose.xlu0.b32.cont [9/16] 0.0, 128
          %1073 = vxpose.xlu0.b32.cont [10/16] 0.0, 128
          %1074 = vxpose.xlu0.b32.cont [11/16] 0.0, 128
          %1075 = vxpose.xlu0.b32.cont [12/16] 0.0, 128
          %1076 = vxpose.xlu0.b32.cont [13/16] 0.0, 128
          %1077 = vxpose.xlu0.b32.cont [14/16] 0.0, 128
          %1078 = vxpose.xlu0.b32.cont [15/16] 0.0, 128
          %1079 = vxpose.xlu0.b32.end [16/16] 0.0, 128
          %v1080 = vpop.trf.xlu0
          %v1081 = vpop.trf.xlu0
          %v1082 = vpop.trf.xlu0
          %v1083 = vpop.trf.xlu0
          %v1084 = vpop.trf.xlu0
          %v1085 = vpop.trf.xlu0
          %v1086 = vpop.trf.xlu0
          %v1087 = vpop.trf.xlu0
          %v1088 = vpop.trf.xlu0
          %v1089 = vpop.trf.xlu0
          %v1090 = vpop.trf.xlu0
          %v1091 = vpop.trf.xlu0
          %v1092 = vpop.trf.xlu0
          %v1093 = vpop.trf.xlu0
          %v1094 = vpop.trf.xlu0
          %v1095 = vpop.trf.xlu0
          %v1096 = vpack.c.bf16 %v1080, %v1080
          %s1097 = scalar_lea.vmem [#allocation6], 12
          %1098 = vst.msk [vmem:[%s1097] sm:$0xf] %vm749, %v1096
          %1099 = vxpose.xlu0.b32.start [1/16] %v713, 128
          %1100 = vxpose.xlu0.b32.cont [2/16] 0.0, 128
          %1101 = vxpose.xlu0.b32.cont [3/16] 0.0, 128
          %1102 = vxpose.xlu0.b32.cont [4/16] 0.0, 128
          %1103 = vxpose.xlu0.b32.cont [5/16] 0.0, 128
          %1104 = vxpose.xlu0.b32.cont [6/16] 0.0, 128
          %1105 = vxpose.xlu0.b32.cont [7/16] 0.0, 128
          %1106 = vxpose.xlu0.b32.cont [8/16] 0.0, 128
          %1107 = vxpose.xlu0.b32.cont [9/16] 0.0, 128
          %1108 = vxpose.xlu0.b32.cont [10/16] 0.0, 128
          %1109 = vxpose.xlu0.b32.cont [11/16] 0.0, 128
          %1110 = vxpose.xlu0.b32.cont [12/16] 0.0, 128
          %1111 = vxpose.xlu0.b32.cont [13/16] 0.0, 128
          %1112 = vxpose.xlu0.b32.cont [14/16] 0.0, 128
          %1113 = vxpose.xlu0.b32.cont [15/16] 0.0, 128
          %1114 = vxpose.xlu0.b32.end [16/16] 0.0, 128
          %v1115 = vpop.trf.xlu0
          %v1116 = vpop.trf.xlu0
          %v1117 = vpop.trf.xlu0
          %v1118 = vpop.trf.xlu0
          %v1119 = vpop.trf.xlu0
          %v1120 = vpop.trf.xlu0
          %v1121 = vpop.trf.xlu0
          %v1122 = vpop.trf.xlu0
          %v1123 = vpop.trf.xlu0
          %v1124 = vpop.trf.xlu0
          %v1125 = vpop.trf.xlu0
          %v1126 = vpop.trf.xlu0
          %v1127 = vpop.trf.xlu0
          %v1128 = vpop.trf.xlu0
          %v1129 = vpop.trf.xlu0
          %v1130 = vpop.trf.xlu0
          %v1131 = vpack.c.bf16 %v1115, %v1115
          %s1132 = scalar_lea.vmem [#allocation7], 12
          %1133 = vst.msk [vmem:[%s1132] sm:$0xf] %vm749, %v1131
          %v1134 = vlaneseq
          %v1135 = vshrl.u32 %v1134, 7
          %v1136 = vlaneseq
          %v1137 = vand.u32 %v1136, 127
          %vm1138 = vcmp.gt.s32.totalorder %v1137, %v1135
          %v1139 = vld [vmem:[#allocation5] sm:$0xf]
          %v1140 = vld [vmem:[#allocation5 + $0x4] sm:$0xf]
          %v1141 = vld [vmem:[#allocation5 + $0x8] sm:$0xf]
          %v1142 = vld [vmem:[#allocation5 + $0xc] sm:$0xf]
          %v1143 = vld [vmem:[#allocation6] sm:$0xf]
          %v1144 = vld [vmem:[#allocation6 + $0x4] sm:$0xf]
          %v1145 = vld [vmem:[#allocation6 + $0x8] sm:$0xf]
          %v1146 = vld [vmem:[#allocation6 + $0xc] sm:$0xf]
          %v1147 = vld [vmem:[#allocation7] sm:$0xf]
          %v1148 = vld [vmem:[#allocation7 + $0x4] sm:$0xf]
          %v1149 = vld [vmem:[#allocation7 + $0x8] sm:$0xf]
          %v1150 = vld [vmem:[#allocation7 + $0xc] sm:$0xf]
          %vm1151 = vcmask 64512
          %v1153 = vsel %vm1151, %v1139, 0
          %v1156 = vsel %vm1151, %v1143, 0
          %1158 = vmatprep.subr.bf16.mxu0 0
          %1159 = vmatpush1.bf16.xpose.msra.mxu0 0
          %1160 = vmatprep.subr.bf16.mxu0 0
          %1161 = vmatpush1.bf16.xpose.msra.mxu0 0
          %1162 = vmatprep.subr.bf16.mxu0 0
          %1163 = vmatpush1.bf16.xpose.msra.mxu0 0
          %1164 = vmatprep.subr.bf16.mxu0 0
          %1165 = vmatpush1.bf16.xpose.msra.mxu0 0
          %1166 = vmatprep.subr.bf16.mxu0 0
          %1167 = vmatpush1.bf16.xpose.msra.mxu0 0
          %1168 = vmatprep.subr.bf16.mxu0 0
          %1169 = vmatpush1.bf16.xpose.msra.mxu0 0
          %1170 = vmatprep.subr.bf16.mxu0 0
          %1171 = vmatpush1.bf16.xpose.msra.mxu0 0
          %1172 = vmatprep.subr.bf16.mxu0 0
          %1173 = vmatpush1.bf16.xpose.msra.mxu0 %v1156
          %1174 = vmatprep.subr.bf16.mxu0 0
          %1175 = vmatpush2.bf16.xpose.msra.mxu0 0
          %1176 = vmatprep.subr.bf16.mxu0 0
          %1177 = vmatpush2.bf16.xpose.msra.mxu0 0
          %1178 = vmatprep.subr.bf16.mxu0 0
          %1179 = vmatpush2.bf16.xpose.msra.mxu0 0
          %1180 = vmatprep.subr.bf16.mxu0 0
          %1181 = vmatpush2.bf16.xpose.msra.mxu0 0
          %1182 = vmatprep.subr.bf16.mxu0 0
          %1183 = vmatpush2.bf16.xpose.msra.mxu0 0
          %1184 = vmatprep.subr.bf16.mxu0 0
          %1185 = vmatpush2.bf16.xpose.msra.mxu0 0
          %1186 = vmatprep.subr.bf16.mxu0 0
          %1187 = vmatpush2.bf16.xpose.msra.mxu0 0
          %1188 = vmatprep.subr.bf16.mxu0 0
          %1189 = vmatpush2.bf16.xpose.msra.mxu0 0
          %1190 = vmatprep.mubr.bf16.mxu0 0
          %1191 = vmatmul.mubr.bf16.gmra.mxu0 %v1153
          %v1192 = vpop.f32.mrf.mxu0
          %v1193 = vadd.f32 0.0, %v1192
          %v1194 = vpop.f32.mrf.mxu0
          %v1195 = vpop.f32.mrf.mxu0
          %v1196 = vpop.f32.mrf.mxu0
          %1197 = vdwg.mxu0
          %v1199 = vsel %vm1151, %v1140, 0
          %v1202 = vsel %vm1151, %v1144, 0
          %1204 = vmatprep.subr.bf16.mxu0 0
          %1205 = vmatpush1.bf16.xpose.msra.mxu0 0
          %1206 = vmatprep.subr.bf16.mxu0 0
          %1207 = vmatpush1.bf16.xpose.msra.mxu0 0
          %1208 = vmatprep.subr.bf16.mxu0 0
          %1209 = vmatpush1.bf16.xpose.msra.mxu0 0
          %1210 = vmatprep.subr.bf16.mxu0 0
          %1211 = vmatpush1.bf16.xpose.msra.mxu0 0
          %1212 = vmatprep.subr.bf16.mxu0 0
          %1213 = vmatpush1.bf16.xpose.msra.mxu0 0
          %1214 = vmatprep.subr.bf16.mxu0 0
          %1215 = vmatpush1.bf16.xpose.msra.mxu0 0
          %1216 = vmatprep.subr.bf16.mxu0 0
          %1217 = vmatpush1.bf16.xpose.msra.mxu0 0
          %1218 = vmatprep.subr.bf16.mxu0 0
          %1219 = vmatpush1.bf16.xpose.msra.mxu0 %v1202
          %1220 = vmatprep.subr.bf16.mxu0 0
          %1221 = vmatpush2.bf16.xpose.msra.mxu0 0
          %1222 = vmatprep.subr.bf16.mxu0 0
          %1223 = vmatpush2.bf16.xpose.msra.mxu0 0
          %1224 = vmatprep.subr.bf16.mxu0 0
          %1225 = vmatpush2.bf16.xpose.msra.mxu0 0
          %1226 = vmatprep.subr.bf16.mxu0 0
          %1227 = vmatpush2.bf16.xpose.msra.mxu0 0
          %1228 = vmatprep.subr.bf16.mxu0 0
          %1229 = vmatpush2.bf16.xpose.msra.mxu0 0
          %1230 = vmatprep.subr.bf16.mxu0 0
          %1231 = vmatpush2.bf16.xpose.msra.mxu0 0
          %1232 = vmatprep.subr.bf16.mxu0 0
          %1233 = vmatpush2.bf16.xpose.msra.mxu0 0
          %1234 = vmatprep.subr.bf16.mxu0 0
          %1235 = vmatpush2.bf16.xpose.msra.mxu0 0
          %1236 = vmatprep.mubr.bf16.mxu0 0
          %1237 = vmatmul.mubr.bf16.gmra.mxu0 %v1199
          %v1238 = vpop.f32.mrf.mxu0
          %v1239 = vadd.f32 0.0, %v1238
          %v1240 = vpop.f32.mrf.mxu0
          %v1241 = vpop.f32.mrf.mxu0
          %v1242 = vpop.f32.mrf.mxu0
          %1243 = vdwg.mxu0
          %v1245 = vsel %vm1151, %v1141, 0
          %v1248 = vsel %vm1151, %v1145, 0
          %1250 = vmatprep.subr.bf16.mxu0 0
          %1251 = vmatpush1.bf16.xpose.msra.mxu0 0
          %1252 = vmatprep.subr.bf16.mxu0 0
          %1253 = vmatpush1.bf16.xpose.msra.mxu0 0
          %1254 = vmatprep.subr.bf16.mxu0 0
          %1255 = vmatpush1.bf16.xpose.msra.mxu0 0
          %1256 = vmatprep.subr.bf16.mxu0 0
          %1257 = vmatpush1.bf16.xpose.msra.mxu0 0
          %1258 = vmatprep.subr.bf16.mxu0 0
          %1259 = vmatpush1.bf16.xpose.msra.mxu0 0
          %1260 = vmatprep.subr.bf16.mxu0 0
          %1261 = vmatpush1.bf16.xpose.msra.mxu0 0
          %1262 = vmatprep.subr.bf16.mxu0 0
          %1263 = vmatpush1.bf16.xpose.msra.mxu0 0
          %1264 = vmatprep.subr.bf16.mxu0 0
          %1265 = vmatpush1.bf16.xpose.msra.mxu0 %v1248
          %1266 = vmatprep.subr.bf16.mxu0 0
          %1267 = vmatpush2.bf16.xpose.msra.mxu0 0
          %1268 = vmatprep.subr.bf16.mxu0 0
          %1269 = vmatpush2.bf16.xpose.msra.mxu0 0
          %1270 = vmatprep.subr.bf16.mxu0 0
          %1271 = vmatpush2.bf16.xpose.msra.mxu0 0
          %1272 = vmatprep.subr.bf16.mxu0 0
          %1273 = vmatpush2.bf16.xpose.msra.mxu0 0
          %1274 = vmatprep.subr.bf16.mxu0 0
          %1275 = vmatpush2.bf16.xpose.msra.mxu0 0
          %1276 = vmatprep.subr.bf16.mxu0 0
          %1277 = vmatpush2.bf16.xpose.msra.mxu0 0
          %1278 = vmatprep.subr.bf16.mxu0 0
          %1279 = vmatpush2.bf16.xpose.msra.mxu0 0
          %1280 = vmatprep.subr.bf16.mxu0 0
          %1281 = vmatpush2.bf16.xpose.msra.mxu0 0
          %1282 = vmatprep.mubr.bf16.mxu0 0
          %1283 = vmatmul.mubr.bf16.gmra.mxu0 %v1245
          %v1284 = vpop.f32.mrf.mxu0
          %v1285 = vadd.f32 0.0, %v1284
          %v1286 = vpop.f32.mrf.mxu0
          %v1287 = vpop.f32.mrf.mxu0
          %v1288 = vpop.f32.mrf.mxu0
          %1289 = vdwg.mxu0
          %v1291 = vsel %vm1151, %v1142, 0
          %v1294 = vsel %vm1151, %v1146, 0
          %1296 = vmatprep.subr.bf16.mxu0 0
          %1297 = vmatpush1.bf16.xpose.msra.mxu0 0
          %1298 = vmatprep.subr.bf16.mxu0 0
          %1299 = vmatpush1.bf16.xpose.msra.mxu0 0
          %1300 = vmatprep.subr.bf16.mxu0 0
          %1301 = vmatpush1.bf16.xpose.msra.mxu0 0
          %1302 = vmatprep.subr.bf16.mxu0 0
          %1303 = vmatpush1.bf16.xpose.msra.mxu0 0
          %1304 = vmatprep.subr.bf16.mxu0 0
          %1305 = vmatpush1.bf16.xpose.msra.mxu0 0
          %1306 = vmatprep.subr.bf16.mxu0 0
          %1307 = vmatpush1.bf16.xpose.msra.mxu0 0
          %1308 = vmatprep.subr.bf16.mxu0 0
          %1309 = vmatpush1.bf16.xpose.msra.mxu0 0
          %1310 = vmatprep.subr.bf16.mxu0 0
          %1311 = vmatpush1.bf16.xpose.msra.mxu0 %v1294
          %1312 = vmatprep.subr.bf16.mxu0 0
          %1313 = vmatpush2.bf16.xpose.msra.mxu0 0
          %1314 = vmatprep.subr.bf16.mxu0 0
          %1315 = vmatpush2.bf16.xpose.msra.mxu0 0
          %1316 = vmatprep.subr.bf16.mxu0 0
          %1317 = vmatpush2.bf16.xpose.msra.mxu0 0
          %1318 = vmatprep.subr.bf16.mxu0 0
          %1319 = vmatpush2.bf16.xpose.msra.mxu0 0
          %1320 = vmatprep.subr.bf16.mxu0 0
          %1321 = vmatpush2.bf16.xpose.msra.mxu0 0
          %1322 = vmatprep.subr.bf16.mxu0 0
          %1323 = vmatpush2.bf16.xpose.msra.mxu0 0
          %1324 = vmatprep.subr.bf16.mxu0 0
          %1325 = vmatpush2.bf16.xpose.msra.mxu0 0
          %1326 = vmatprep.subr.bf16.mxu0 0
          %1327 = vmatpush2.bf16.xpose.msra.mxu0 0
          %1328 = vmatprep.mubr.bf16.mxu0 0
          %1329 = vmatmul.mubr.bf16.gmra.mxu0 %v1291
          %v1330 = vpop.f32.mrf.mxu0
          %v1331 = vadd.f32 0.0, %v1330
          %v1332 = vpop.f32.mrf.mxu0
          %v1333 = vpop.f32.mrf.mxu0
          %v1334 = vpop.f32.mrf.mxu0
          %1335 = vdwg.mxu0
          %v1336 = vsel %vm1138, 1, 0
          %vm1337 = vcmp.eq.s32.totalorder %v1336, 1
          %v1338 = vsel %vm1337, -1e+30, %v1193
          %v1339 = vsel %vm1337, -1e+30, %v1239
          %v1340 = vsel %vm1337, -1e+30, %v1285
          %v1341 = vsel %vm1337, -1e+30, %v1331
          %v1342 = vsel %vm1151, %v1338, -inf
          %1343 = vmax.xlane.f32.xlu0 %v1342
          %v1344 = vpop.xlane.xlu0 %1343
          %v1345 = vsel %vm1151, %v1339, -inf
          %1346 = vmax.xlane.f32.xlu0 %v1345
          %v1347 = vpop.xlane.xlu0 %1346
          %v1348 = vsel %vm1151, %v1340, -inf
          %1349 = vmax.xlane.f32.xlu0 %v1348
          %v1350 = vpop.xlane.xlu0 %1349
          %v1351 = vsel %vm1151, %v1341, -inf
          %1352 = vmax.xlane.f32.xlu0 %v1351
          %v1353 = vpop.xlane.xlu0 %1352
          %v1354 = vsub.f32 -inf, %v1344
          %v1355 = vsub.f32 -inf, %v1347
          %v1356 = vsub.f32 -inf, %v1350
          %v1357 = vsub.f32 -inf, %v1353
          %v1358 = vmul.f32 %v1354, 1.442695
          %v1359 = vpow.pop %v1358
          %v1360 = vmul.f32 %v1355, 1.442695
          %v1361 = vpow.pop %v1360
          %v1362 = vmul.f32 %v1356, 1.442695
          %v1363 = vpow.pop %v1362
          %v1364 = vmul.f32 %v1357, 1.442695
          %v1365 = vpow.pop %v1364
          %v1366 = vsub.f32 %v1338, %v1344
          %v1367 = vsub.f32 %v1339, %v1347
          %v1368 = vsub.f32 %v1340, %v1350
          %v1369 = vsub.f32 %v1341, %v1353
          %v1370 = vmul.f32 %v1366, 1.442695
          %v1371 = vpow.pop %v1370
          %v1372 = vmul.f32 %v1367, 1.442695
          %v1373 = vpow.pop %v1372
          %v1374 = vmul.f32 %v1368, 1.442695
          %v1375 = vpow.pop %v1374
          %v1376 = vmul.f32 %v1369, 1.442695
          %v1377 = vpow.pop %v1376
          %v1378 = vmul.f32 %v1359, 0.0
          %v1379 = vmul.f32 %v1361, 0.0
          %v1380 = vmul.f32 %v1363, 0.0
          %v1381 = vmul.f32 %v1365, 0.0
          %v1382 = vsel %vm1151, %v1371, 0.0
          %1383 = vadd.xlane.f32.xlu0 %v1382
          %v1384 = vpop.xlane.xlu0 %1383
          %v1385 = vsel %vm1151, %v1373, 0.0
          %1386 = vadd.xlane.f32.xlu0 %v1385
          %v1387 = vpop.xlane.xlu0 %1386
          %v1388 = vsel %vm1151, %v1375, 0.0
          %1389 = vadd.xlane.f32.xlu0 %v1388
          %v1390 = vpop.xlane.xlu0 %1389
          %v1391 = vsel %vm1151, %v1377, 0.0
          %1392 = vadd.xlane.f32.xlu0 %v1391
          %v1393 = vpop.xlane.xlu0 %1392
          %v1394 = vadd.f32 %v1378, %v1384
          %v1395 = vadd.f32 %v1379, %v1387
          %v1396 = vadd.f32 %v1380, %v1390
          %v1397 = vadd.f32 %v1381, %v1393
          %v1398 = vpack.c.bf16 %v1371, %v1371
          %v1399 = vpack.c.bf16 %v1373, %v1373
          %v1400 = vpack.c.bf16 %v1375, %v1375
          %v1401 = vpack.c.bf16 %v1377, %v1377
          %v1403 = vsel %vm1151, %v1398, 0
          %vm1405 = vcmask 1043456
          %v1407 = vsel %vm1405, %v1147, 0
          %1409 = vmatprep.subr.bf16.mxu0 0
          %1410 = vmatpush1.bf16.msra.mxu0 0
          %1411 = vmatprep.subr.bf16.mxu0 0
          %1412 = vmatpush1.bf16.msra.mxu0 0
          %1413 = vmatprep.subr.bf16.mxu0 0
          %1414 = vmatpush1.bf16.msra.mxu0 0
          %1415 = vmatprep.subr.bf16.mxu0 0
          %1416 = vmatpush1.bf16.msra.mxu0 0
          %1417 = vmatprep.subr.bf16.mxu0 0
          %1418 = vmatpush1.bf16.msra.mxu0 0
          %1419 = vmatprep.subr.bf16.mxu0 0
          %1420 = vmatpush1.bf16.msra.mxu0 0
          %1421 = vmatprep.subr.bf16.mxu0 0
          %1422 = vmatpush1.bf16.msra.mxu0 0
          %1423 = vmatprep.subr.bf16.mxu0 0
          %1424 = vmatpush1.bf16.msra.mxu0 %v1407
          %1425 = vmatprep.subr.bf16.mxu0 0
          %1426 = vmatpush2.bf16.msra.mxu0 0
          %1427 = vmatprep.subr.bf16.mxu0 0
          %1428 = vmatpush2.bf16.msra.mxu0 0
          %1429 = vmatprep.subr.bf16.mxu0 0
          %1430 = vmatpush2.bf16.msra.mxu0 0
          %1431 = vmatprep.subr.bf16.mxu0 0
          %1432 = vmatpush2.bf16.msra.mxu0 0
          %1433 = vmatprep.subr.bf16.mxu0 0
          %1434 = vmatpush2.bf16.msra.mxu0 0
          %1435 = vmatprep.subr.bf16.mxu0 0
          %1436 = vmatpush2.bf16.msra.mxu0 0
          %1437 = vmatprep.subr.bf16.mxu0 0
          %1438 = vmatpush2.bf16.msra.mxu0 0
          %1439 = vmatprep.subr.bf16.mxu0 0
          %1440 = vmatpush2.bf16.msra.mxu0 0
          %1441 = vmatprep.mubr.bf16.mxu0 0
          %1442 = vmatmul.mubr.bf16.gmra.mxu0 %v1403
          %v1443 = vpop.f32.mrf.mxu0
          %v1444 = vadd.f32 0.0, %v1443
          %v1445 = vpop.f32.mrf.mxu0
          %v1446 = vpop.f32.mrf.mxu0
          %v1447 = vpop.f32.mrf.mxu0
          %1448 = vdwg.mxu0
          %v1450 = vsel %vm1151, %v1399, 0
          %v1453 = vsel %vm1405, %v1148, 0
          %1455 = vmatprep.subr.bf16.mxu0 0
          %1456 = vmatpush1.bf16.msra.mxu0 0
          %1457 = vmatprep.subr.bf16.mxu0 0
          %1458 = vmatpush1.bf16.msra.mxu0 0
          %1459 = vmatprep.subr.bf16.mxu0 0
          %1460 = vmatpush1.bf16.msra.mxu0 0
          %1461 = vmatprep.subr.bf16.mxu0 0
          %1462 = vmatpush1.bf16.msra.mxu0 0
          %1463 = vmatprep.subr.bf16.mxu0 0
          %1464 = vmatpush1.bf16.msra.mxu0 0
          %1465 = vmatprep.subr.bf16.mxu0 0
          %1466 = vmatpush1.bf16.msra.mxu0 0
          %1467 = vmatprep.subr.bf16.mxu0 0
          %1468 = vmatpush1.bf16.msra.mxu0 0
          %1469 = vmatprep.subr.bf16.mxu0 0
          %1470 = vmatpush1.bf16.msra.mxu0 %v1453
          %1471 = vmatprep.subr.bf16.mxu0 0
          %1472 = vmatpush2.bf16.msra.mxu0 0
          %1473 = vmatprep.subr.bf16.mxu0 0
          %1474 = vmatpush2.bf16.msra.mxu0 0
          %1475 = vmatprep.subr.bf16.mxu0 0
          %1476 = vmatpush2.bf16.msra.mxu0 0
          %1477 = vmatprep.subr.bf16.mxu0 0
          %1478 = vmatpush2.bf16.msra.mxu0 0
          %1479 = vmatprep.subr.bf16.mxu0 0
          %1480 = vmatpush2.bf16.msra.mxu0 0
          %1481 = vmatprep.subr.bf16.mxu0 0
          %1482 = vmatpush2.bf16.msra.mxu0 0
          %1483 = vmatprep.subr.bf16.mxu0 0
          %1484 = vmatpush2.bf16.msra.mxu0 0
          %1485 = vmatprep.subr.bf16.mxu0 0
          %1486 = vmatpush2.bf16.msra.mxu0 0
          %1487 = vmatprep.mubr.bf16.mxu0 0
          %1488 = vmatmul.mubr.bf16.gmra.mxu0 %v1450
          %v1489 = vpop.f32.mrf.mxu0
          %v1490 = vadd.f32 0.0, %v1489
          %v1491 = vpop.f32.mrf.mxu0
          %v1492 = vpop.f32.mrf.mxu0
          %v1493 = vpop.f32.mrf.mxu0
          %1494 = vdwg.mxu0
          %v1496 = vsel %vm1151, %v1400, 0
          %v1499 = vsel %vm1405, %v1149, 0
          %1501 = vmatprep.subr.bf16.mxu0 0
          %1502 = vmatpush1.bf16.msra.mxu0 0
          %1503 = vmatprep.subr.bf16.mxu0 0
          %1504 = vmatpush1.bf16.msra.mxu0 0
          %1505 = vmatprep.subr.bf16.mxu0 0
          %1506 = vmatpush1.bf16.msra.mxu0 0
          %1507 = vmatprep.subr.bf16.mxu0 0
          %1508 = vmatpush1.bf16.msra.mxu0 0
          %1509 = vmatprep.subr.bf16.mxu0 0
          %1510 = vmatpush1.bf16.msra.mxu0 0
          %1511 = vmatprep.subr.bf16.mxu0 0
          %1512 = vmatpush1.bf16.msra.mxu0 0
          %1513 = vmatprep.subr.bf16.mxu0 0
          %1514 = vmatpush1.bf16.msra.mxu0 0
          %1515 = vmatprep.subr.bf16.mxu0 0
          %1516 = vmatpush1.bf16.msra.mxu0 %v1499
          %1517 = vmatprep.subr.bf16.mxu0 0
          %1518 = vmatpush2.bf16.msra.mxu0 0
          %1519 = vmatprep.subr.bf16.mxu0 0
          %1520 = vmatpush2.bf16.msra.mxu0 0
          %1521 = vmatprep.subr.bf16.mxu0 0
          %1522 = vmatpush2.bf16.msra.mxu0 0
          %1523 = vmatprep.subr.bf16.mxu0 0
          %1524 = vmatpush2.bf16.msra.mxu0 0
          %1525 = vmatprep.subr.bf16.mxu0 0
          %1526 = vmatpush2.bf16.msra.mxu0 0
          %1527 = vmatprep.subr.bf16.mxu0 0
          %1528 = vmatpush2.bf16.msra.mxu0 0
          %1529 = vmatprep.subr.bf16.mxu0 0
          %1530 = vmatpush2.bf16.msra.mxu0 0
          %1531 = vmatprep.subr.bf16.mxu0 0
          %1532 = vmatpush2.bf16.msra.mxu0 0
          %1533 = vmatprep.mubr.bf16.mxu0 0
          %1534 = vmatmul.mubr.bf16.gmra.mxu0 %v1496
          %v1535 = vpop.f32.mrf.mxu0
          %v1536 = vadd.f32 0.0, %v1535
          %v1537 = vpop.f32.mrf.mxu0
          %v1538 = vpop.f32.mrf.mxu0
          %v1539 = vpop.f32.mrf.mxu0
          %1540 = vdwg.mxu0
          %v1542 = vsel %vm1151, %v1401, 0
          %v1545 = vsel %vm1405, %v1150, 0
          %1547 = vmatprep.subr.bf16.mxu0 0
          %1548 = vmatpush1.bf16.msra.mxu0 0
          %1549 = vmatprep.subr.bf16.mxu0 0
          %1550 = vmatpush1.bf16.msra.mxu0 0
          %1551 = vmatprep.subr.bf16.mxu0 0
          %1552 = vmatpush1.bf16.msra.mxu0 0
          %1553 = vmatprep.subr.bf16.mxu0 0
          %1554 = vmatpush1.bf16.msra.mxu0 0
          %1555 = vmatprep.subr.bf16.mxu0 0
          %1556 = vmatpush1.bf16.msra.mxu0 0
          %1557 = vmatprep.subr.bf16.mxu0 0
          %1558 = vmatpush1.bf16.msra.mxu0 0
          %1559 = vmatprep.subr.bf16.mxu0 0
          %1560 = vmatpush1.bf16.msra.mxu0 0
          %1561 = vmatprep.subr.bf16.mxu0 0
          %1562 = vmatpush1.bf16.msra.mxu0 %v1545
          %1563 = vmatprep.subr.bf16.mxu0 0
          %1564 = vmatpush2.bf16.msra.mxu0 0
          %1565 = vmatprep.subr.bf16.mxu0 0
          %1566 = vmatpush2.bf16.msra.mxu0 0
          %1567 = vmatprep.subr.bf16.mxu0 0
          %1568 = vmatpush2.bf16.msra.mxu0 0
          %1569 = vmatprep.subr.bf16.mxu0 0
          %1570 = vmatpush2.bf16.msra.mxu0 0
          %1571 = vmatprep.subr.bf16.mxu0 0
          %1572 = vmatpush2.bf16.msra.mxu0 0
          %1573 = vmatprep.subr.bf16.mxu0 0
          %1574 = vmatpush2.bf16.msra.mxu0 0
          %1575 = vmatprep.subr.bf16.mxu0 0
          %1576 = vmatpush2.bf16.msra.mxu0 0
          %1577 = vmatprep.subr.bf16.mxu0 0
          %1578 = vmatpush2.bf16.msra.mxu0 0
          %1579 = vmatprep.mubr.bf16.mxu0 0
          %1580 = vmatmul.mubr.bf16.gmra.mxu0 %v1542
          %v1581 = vpop.f32.mrf.mxu0
          %v1582 = vadd.f32 0.0, %v1581
          %v1583 = vpop.f32.mrf.mxu0
          %v1584 = vpop.f32.mrf.mxu0
          %v1585 = vpop.f32.mrf.mxu0
          %1586 = vdwg.mxu0
          %v1587 = vadd.f32 %v1378, %v1444
          %v1588 = vadd.f32 %v1379, %v1490
          %v1589 = vadd.f32 %v1380, %v1536
          %v1590 = vadd.f32 %v1381, %v1582
          %v1591 = vrcp.pop %v1394
          %v1592 = vrcp.pop %v1395
          %v1593 = vrcp.pop %v1396
          %v1594 = vrcp.pop %v1397
          %v1595 = vmul.f32 %v1587, %v1591
          %v1596 = vmul.f32 %v1588, %v1592
          %v1597 = vmul.f32 %v1589, %v1593
          %v1598 = vmul.f32 %v1590, %v1594
          %v1599 = vpack.c.bf16 %v1595, %v1595
          %v1600 = vpack.c.bf16 %v1596, %v1596
          %v1601 = vpack.c.bf16 %v1597, %v1597
          %v1602 = vpack.c.bf16 %v1598, %v1598
          %v1603 = vld [vmem:[%s5] sm:$0xf]
          %v1604 = vld [vmem:[%s5 + $0x4] sm:$0xf]
          %v1605 = vld [vmem:[%s5 + $0x8] sm:$0xf]
          %v1606 = vld [vmem:[%s5 + $0xc] sm:$0xf]
          %v1608 = vsel %vm1151, %v1599, 0
          %v1611 = vsel %vm1405, %v1603, 0
          %1613 = vmatprep.subr.bf16.mxu0 0
          %1614 = vmatpush1.bf16.msra.mxu0 0
          %1615 = vmatprep.subr.bf16.mxu0 0
          %1616 = vmatpush1.bf16.msra.mxu0 0
          %1617 = vmatprep.subr.bf16.mxu0 0
          %1618 = vmatpush1.bf16.msra.mxu0 0
          %1619 = vmatprep.subr.bf16.mxu0 0
          %1620 = vmatpush1.bf16.msra.mxu0 0
          %1621 = vmatprep.subr.bf16.mxu0 0
          %1622 = vmatpush1.bf16.msra.mxu0 0
          %1623 = vmatprep.subr.bf16.mxu0 0
          %1624 = vmatpush1.bf16.msra.mxu0 0
          %1625 = vmatprep.subr.bf16.mxu0 0
          %1626 = vmatpush1.bf16.msra.mxu0 0
          %1627 = vmatprep.subr.bf16.mxu0 0
          %1628 = vmatpush1.bf16.msra.mxu0 %v1611
          %1629 = vmatprep.subr.bf16.mxu0 0
          %1630 = vmatpush2.bf16.msra.mxu0 0
          %1631 = vmatprep.subr.bf16.mxu0 0
          %1632 = vmatpush2.bf16.msra.mxu0 0
          %1633 = vmatprep.subr.bf16.mxu0 0
          %1634 = vmatpush2.bf16.msra.mxu0 0
          %1635 = vmatprep.subr.bf16.mxu0 0
          %1636 = vmatpush2.bf16.msra.mxu0 0
          %1637 = vmatprep.subr.bf16.mxu0 0
          %1638 = vmatpush2.bf16.msra.mxu0 0
          %1639 = vmatprep.subr.bf16.mxu0 0
          %1640 = vmatpush2.bf16.msra.mxu0 0
          %1641 = vmatprep.subr.bf16.mxu0 0
          %1642 = vmatpush2.bf16.msra.mxu0 0
          %1643 = vmatprep.subr.bf16.mxu0 0
          %1644 = vmatpush2.bf16.msra.mxu0 0
          %1645 = vmatprep.mubr.bf16.mxu0 0
          %1646 = vmatmul.mubr.bf16.gmra.mxu0 %v1608
          %v1647 = vpop.f32.mrf.mxu0
          %v1648 = vadd.f32 0.0, %v1647
          %v1649 = vpop.f32.mrf.mxu0
          %v1650 = vpop.f32.mrf.mxu0
          %v1651 = vpop.f32.mrf.mxu0
          %1652 = vdwg.mxu0
          %v1654 = vsel %vm1151, %v1600, 0
          %v1657 = vsel %vm1405, %v1604, 0
          %1659 = vmatprep.subr.bf16.mxu0 0
          %1660 = vmatpush1.bf16.msra.mxu0 0
          %1661 = vmatprep.subr.bf16.mxu0 0
          %1662 = vmatpush1.bf16.msra.mxu0 0
          %1663 = vmatprep.subr.bf16.mxu0 0
          %1664 = vmatpush1.bf16.msra.mxu0 0
          %1665 = vmatprep.subr.bf16.mxu0 0
          %1666 = vmatpush1.bf16.msra.mxu0 0
          %1667 = vmatprep.subr.bf16.mxu0 0
          %1668 = vmatpush1.bf16.msra.mxu0 0
          %1669 = vmatprep.subr.bf16.mxu0 0
          %1670 = vmatpush1.bf16.msra.mxu0 0
          %1671 = vmatprep.subr.bf16.mxu0 0
          %1672 = vmatpush1.bf16.msra.mxu0 0
          %1673 = vmatprep.subr.bf16.mxu0 0
          %1674 = vmatpush1.bf16.msra.mxu0 %v1657
          %1675 = vmatprep.subr.bf16.mxu0 0
          %1676 = vmatpush2.bf16.msra.mxu0 0
          %1677 = vmatprep.subr.bf16.mxu0 0
          %1678 = vmatpush2.bf16.msra.mxu0 0
          %1679 = vmatprep.subr.bf16.mxu0 0
          %1680 = vmatpush2.bf16.msra.mxu0 0
          %1681 = vmatprep.subr.bf16.mxu0 0
          %1682 = vmatpush2.bf16.msra.mxu0 0
          %1683 = vmatprep.subr.bf16.mxu0 0
          %1684 = vmatpush2.bf16.msra.mxu0 0
          %1685 = vmatprep.subr.bf16.mxu0 0
          %1686 = vmatpush2.bf16.msra.mxu0 0
          %1687 = vmatprep.subr.bf16.mxu0 0
          %1688 = vmatpush2.bf16.msra.mxu0 0
          %1689 = vmatprep.subr.bf16.mxu0 0
          %1690 = vmatpush2.bf16.msra.mxu0 0
          %1691 = vmatprep.mubr.bf16.mxu0 0
          %1692 = vmatmul.mubr.bf16.gmra.mxu0 %v1654
          %v1693 = vpop.f32.mrf.mxu0
          %v1694 = vadd.f32 0.0, %v1693
          %v1695 = vpop.f32.mrf.mxu0
          %v1696 = vpop.f32.mrf.mxu0
          %v1697 = vpop.f32.mrf.mxu0
          %1698 = vdwg.mxu0
          %v1700 = vsel %vm1151, %v1601, 0
          %v1703 = vsel %vm1405, %v1605, 0
          %1705 = vmatprep.subr.bf16.mxu0 0
          %1706 = vmatpush1.bf16.msra.mxu0 0
          %1707 = vmatprep.subr.bf16.mxu0 0
          %1708 = vmatpush1.bf16.msra.mxu0 0
          %1709 = vmatprep.subr.bf16.mxu0 0
          %1710 = vmatpush1.bf16.msra.mxu0 0
          %1711 = vmatprep.subr.bf16.mxu0 0
          %1712 = vmatpush1.bf16.msra.mxu0 0
          %1713 = vmatprep.subr.bf16.mxu0 0
          %1714 = vmatpush1.bf16.msra.mxu0 0
          %1715 = vmatprep.subr.bf16.mxu0 0
          %1716 = vmatpush1.bf16.msra.mxu0 0
          %1717 = vmatprep.subr.bf16.mxu0 0
          %1718 = vmatpush1.bf16.msra.mxu0 0
          %1719 = vmatprep.subr.bf16.mxu0 0
          %1720 = vmatpush1.bf16.msra.mxu0 %v1703
          %1721 = vmatprep.subr.bf16.mxu0 0
          %1722 = vmatpush2.bf16.msra.mxu0 0
          %1723 = vmatprep.subr.bf16.mxu0 0
          %1724 = vmatpush2.bf16.msra.mxu0 0
          %1725 = vmatprep.subr.bf16.mxu0 0
          %1726 = vmatpush2.bf16.msra.mxu0 0
          %1727 = vmatprep.subr.bf16.mxu0 0
          %1728 = vmatpush2.bf16.msra.mxu0 0
          %1729 = vmatprep.subr.bf16.mxu0 0
          %1730 = vmatpush2.bf16.msra.mxu0 0
          %1731 = vmatprep.subr.bf16.mxu0 0
          %1732 = vmatpush2.bf16.msra.mxu0 0
          %1733 = vmatprep.subr.bf16.mxu0 0
          %1734 = vmatpush2.bf16.msra.mxu0 0
          %1735 = vmatprep.subr.bf16.mxu0 0
          %1736 = vmatpush2.bf16.msra.mxu0 0
          %1737 = vmatprep.mubr.bf16.mxu0 0
          %1738 = vmatmul.mubr.bf16.gmra.mxu0 %v1700
          %v1739 = vpop.f32.mrf.mxu0
          %v1740 = vadd.f32 0.0, %v1739
          %v1741 = vpop.f32.mrf.mxu0
          %v1742 = vpop.f32.mrf.mxu0
          %v1743 = vpop.f32.mrf.mxu0
          %1744 = vdwg.mxu0
          %v1746 = vsel %vm1151, %v1602, 0
          %v1749 = vsel %vm1405, %v1606, 0
          %1751 = vmatprep.subr.bf16.mxu0 0
          %1752 = vmatpush1.bf16.msra.mxu0 0
          %1753 = vmatprep.subr.bf16.mxu0 0
          %1754 = vmatpush1.bf16.msra.mxu0 0
          %1755 = vmatprep.subr.bf16.mxu0 0
          %1756 = vmatpush1.bf16.msra.mxu0 0
          %1757 = vmatprep.subr.bf16.mxu0 0
          %1758 = vmatpush1.bf16.msra.mxu0 0
          %1759 = vmatprep.subr.bf16.mxu0 0
          %1760 = vmatpush1.bf16.msra.mxu0 0
          %1761 = vmatprep.subr.bf16.mxu0 0
          %1762 = vmatpush1.bf16.msra.mxu0 0
          %1763 = vmatprep.subr.bf16.mxu0 0
          %1764 = vmatpush1.bf16.msra.mxu0 0
          %1765 = vmatprep.subr.bf16.mxu0 0
          %1766 = vmatpush1.bf16.msra.mxu0 %v1749
          %1767 = vmatprep.subr.bf16.mxu0 0
          %1768 = vmatpush2.bf16.msra.mxu0 0
          %1769 = vmatprep.subr.bf16.mxu0 0
          %1770 = vmatpush2.bf16.msra.mxu0 0
          %1771 = vmatprep.subr.bf16.mxu0 0
          %1772 = vmatpush2.bf16.msra.mxu0 0
          %1773 = vmatprep.subr.bf16.mxu0 0
          %1774 = vmatpush2.bf16.msra.mxu0 0
          %1775 = vmatprep.subr.bf16.mxu0 0
          %1776 = vmatpush2.bf16.msra.mxu0 0
          %1777 = vmatprep.subr.bf16.mxu0 0
          %1778 = vmatpush2.bf16.msra.mxu0 0
          %1779 = vmatprep.subr.bf16.mxu0 0
          %1780 = vmatpush2.bf16.msra.mxu0 0
          %1781 = vmatprep.subr.bf16.mxu0 0
          %1782 = vmatpush2.bf16.msra.mxu0 0
          %1783 = vmatprep.mubr.bf16.mxu0 0
          %1784 = vmatmul.mubr.bf16.gmra.mxu0 %v1746
          %v1785 = vpop.f32.mrf.mxu0
          %v1786 = vadd.f32 0.0, %v1785
          %v1787 = vpop.f32.mrf.mxu0
          %v1788 = vpop.f32.mrf.mxu0
          %v1789 = vpop.f32.mrf.mxu0
          %1790 = vdwg.mxu0
          %v1791 = vsel %vm440, %v1648, 0.0
          %v1792 = vsel %vm440, %v1694, 0.0
          %v1793 = vadd.f32 %v1791, %v1792
          %v1794 = vsel %vm440, %v1740, 0.0
          %v1795 = vadd.f32 %v1793, %v1794
          %v1796 = vsel %vm440, %v1786, 0.0
          %v1797 = vadd.f32 %v1795, %v1796
          %v1798 = vld [vmem:[%s6] sm:$0x1]
          %v1800 = vlaneseq
          %v1801 = vshrl.u32 %v1800, 7
          %v1802 = vsub.s32 0, %v1801
          %v1803 = vrot.slane %v1798, %v1802
          %v1805 = vadd.f32 %v1797, %v1803
          %1806 = vst.msk [vmem:[#allocation2] sm:$0xff] %vm440, %v1805
        %v1807 = vld [vmem:[%s435] sm:$0xff]
        %v1808 = vld [vmem:[#allocation2] sm:$0xff]
        %v1809 = vadd.f32 %v1807, %v1808
        %vm1810 = vcmask 261120
        %1811 = vst.msk [vmem:[#allocation2] sm:$0xff] %vm1810, %v1809
        %v1812 = vld [vmem:[%s7] sm:$0x1]
        %v1813 = vld [vmem:[%s8] sm:$0x1]
        %v1814 = vsel %vm1810, %v1809, 0.0
        %1815 = vadd.xlane.f32.xlu0 %v1814
        %v1816 = vpop.xlane.xlu0 %1815
        %v1817 = vrcp.pop 32.0
        %v1818 = vmul.f32 %v1816, %v1817
        %v1819 = vsub.f32 %v1809, %v1818
        %v1820 = vmul.f32 %v1819, %v1819
        %v1821 = vsel %vm1810, %v1820, 0.0
        %1822 = vadd.xlane.f32.xlu0 %v1821
        %v1823 = vpop.xlane.xlu0 %1822
        %v1824 = vmul.f32 %v1823, %v1817
        %v1825 = vadd.f32 %v1824, 1e-05
        %v1826 = vrsqrt.pop %v1825
        %v1827 = vmul.f32 %v1819, %v1826
        %v1829 = vlaneseq
        %v1830 = vshrl.u32 %v1829, 7
        %v1831 = vsub.s32 0, %v1830
        %v1832 = vrot.slane %v1812, %v1831
        %v1834 = vmul.f32 %v1827, %v1832
        %v1836 = vlaneseq
        %v1837 = vshrl.u32 %v1836, 7
        %v1838 = vsub.s32 0, %v1837
        %v1839 = vrot.slane %v1813, %v1838
        %v1841 = vadd.f32 %v1834, %v1839
        %v1842 = vpack.c.bf16 %v1841, %v1841
        %v1843 = vld [vmem:[%s9] sm:$0xf]
        %v1844 = vld [vmem:[%s9 + $0x4] sm:$0xf]
        %v1845 = vld [vmem:[%s9 + $0x8] sm:$0xf]
        %v1846 = vld [vmem:[%s9 + $0xc] sm:$0xf]
        %v1847 = vld [vmem:[%s10] sm:$0x1]
        %v1849 = vlaneseq
        %v1850 = vshrl.u32 %v1849, 7
        %v1851 = vsub.s32 0, %v1850
        %v1852 = vrot.slane %v1847, %v1851
        %v1858 = vunpack.c.l.b16 %v1843
        %v1859 = vunpack.c.l.b16 %v1844
        %v1860 = vunpack.c.l.b16 %v1845
        %v1861 = vunpack.c.l.b16 %v1846
        %v1862 = vpack.c.b16 %v1859, %v1858
        %v1863 = vpack.c.b16 %v1861, %v1860
        %v1867 = vsel %vm1810, %v1842, 0
        %1869 = vmatprep.subr.bf16.mxu0 0
        %1870 = vmatpush1.bf16.msra.mxu0 0
        %1871 = vmatprep.subr.bf16.mxu0 0
        %1872 = vmatpush1.bf16.msra.mxu0 0
        %1873 = vmatprep.subr.bf16.mxu0 0
        %1874 = vmatpush1.bf16.msra.mxu0 0
        %1875 = vmatprep.subr.bf16.mxu0 0
        %1876 = vmatpush1.bf16.msra.mxu0 0
        %1877 = vmatprep.subr.bf16.mxu0 0
        %1878 = vmatpush1.bf16.msra.mxu0 0
        %1879 = vmatprep.subr.bf16.mxu0 0
        %1880 = vmatpush1.bf16.msra.mxu0 0
        %1881 = vmatprep.subr.bf16.mxu0 0
        %1882 = vmatpush1.bf16.msra.mxu0 %v1863
        %1883 = vmatprep.subr.bf16.mxu0 0
        %1884 = vmatpush1.bf16.msra.mxu0 %v1862
        %1885 = vmatprep.subr.bf16.mxu0 0
        %1886 = vmatpush2.bf16.msra.mxu0 0
        %1887 = vmatprep.subr.bf16.mxu0 0
        %1888 = vmatpush2.bf16.msra.mxu0 0
        %1889 = vmatprep.subr.bf16.mxu0 0
        %1890 = vmatpush2.bf16.msra.mxu0 0
        %1891 = vmatprep.subr.bf16.mxu0 0
        %1892 = vmatpush2.bf16.msra.mxu0 0
        %1893 = vmatprep.subr.bf16.mxu0 0
        %1894 = vmatpush2.bf16.msra.mxu0 0
        %1895 = vmatprep.subr.bf16.mxu0 0
        %1896 = vmatpush2.bf16.msra.mxu0 0
        %1897 = vmatprep.subr.bf16.mxu0 0
        %1898 = vmatpush2.bf16.msra.mxu0 0
        %1899 = vmatprep.subr.bf16.mxu0 0
        %1900 = vmatpush2.bf16.msra.mxu0 0
        %1901 = vmatprep.mubr.bf16.mxu0 0
        %1902 = vmatmul.mubr.bf16.gmra.mxu0 %v1867
        %v1903 = vpop.f32.mrf.mxu0
        %v1904 = vadd.f32 %v1852, %v1903
        %v1905 = vpop.f32.mrf.mxu0
        %v1906 = vpop.f32.mrf.mxu0
        %v1907 = vpop.f32.mrf.mxu0
        %1908 = vdwg.mxu0
        %v1909 = vmul.f32 %v1904, 0.5
        %v1910 = vmul.f32 %v1904, 0.70710677
        %v1911 = verf.f32.pop %v1910
        %v1912 = vadd.f32 %v1911, 1.0
        %v1913 = vmul.f32 %v1909, %v1912
        %v1914 = vld [vmem:[#allocation2] sm:$0xff]
        %v1915 = vpack.c.bf16 %v1913, %v1913
        %v1916 = vld [vmem:[%s11] sm:$0xf]
        %v1917 = vld [vmem:[%s11 + $0x4] sm:$0xf]
        %v1918 = vld [vmem:[%s11 + $0x8] sm:$0xf]
        %v1919 = vld [vmem:[%s11 + $0xc] sm:$0xf]
        %v1920 = vld [vmem:[%s11 + $0x10] sm:$0xf]
        %v1921 = vld [vmem:[%s11 + $0x14] sm:$0xf]
        %v1922 = vld [vmem:[%s11 + $0x18] sm:$0xf]
        %v1923 = vld [vmem:[%s11 + $0x1c] sm:$0xf]
        %v1924 = vld [vmem:[%s11 + $0x20] sm:$0xf]
        %v1925 = vld [vmem:[%s11 + $0x24] sm:$0xf]
        %v1926 = vld [vmem:[%s11 + $0x28] sm:$0xf]
        %v1927 = vld [vmem:[%s11 + $0x2c] sm:$0xf]
        %v1928 = vld [vmem:[%s11 + $0x30] sm:$0xf]
        %v1929 = vld [vmem:[%s11 + $0x34] sm:$0xf]
        %v1930 = vld [vmem:[%s11 + $0x38] sm:$0xf]
        %v1931 = vld [vmem:[%s11 + $0x3c] sm:$0xf]
        %v1948 = vunpack.c.l.b16 %v1916
        %v1949 = vunpack.c.l.b16 %v1917
        %v1950 = vunpack.c.l.b16 %v1918
        %v1951 = vunpack.c.l.b16 %v1919
        %v1952 = vunpack.c.l.b16 %v1920
        %v1953 = vunpack.c.l.b16 %v1921
        %v1954 = vunpack.c.l.b16 %v1922
        %v1955 = vunpack.c.l.b16 %v1923
        %v1956 = vunpack.c.l.b16 %v1924
        %v1957 = vunpack.c.l.b16 %v1925
        %v1958 = vunpack.c.l.b16 %v1926
        %v1959 = vunpack.c.l.b16 %v1927
        %v1960 = vunpack.c.l.b16 %v1928
        %v1961 = vunpack.c.l.b16 %v1929
        %v1962 = vunpack.c.l.b16 %v1930
        %v1963 = vunpack.c.l.b16 %v1931
        %v1964 = vpack.c.b16 %v1949, %v1948
        %v1965 = vpack.c.b16 %v1951, %v1950
        %v1966 = vpack.c.b16 %v1953, %v1952
        %v1967 = vpack.c.b16 %v1955, %v1954
        %v1968 = vpack.c.b16 %v1957, %v1956
        %v1969 = vpack.c.b16 %v1959, %v1958
        %v1970 = vpack.c.b16 %v1961, %v1960
        %v1971 = vpack.c.b16 %v1963, %v1962
        %1980 = vmatprep.subr.bf16.mxu0 0
        %1981 = vmatpush1.bf16.msra.mxu0 %v1971
        %1982 = vmatprep.subr.bf16.mxu0 0
        %1983 = vmatpush1.bf16.msra.mxu0 %v1970
        %1984 = vmatprep.subr.bf16.mxu0 0
        %1985 = vmatpush1.bf16.msra.mxu0 %v1969
        %1986 = vmatprep.subr.bf16.mxu0 0
        %1987 = vmatpush1.bf16.msra.mxu0 %v1968
        %1988 = vmatprep.subr.bf16.mxu0 0
        %1989 = vmatpush1.bf16.msra.mxu0 %v1967
        %1990 = vmatprep.subr.bf16.mxu0 0
        %1991 = vmatpush1.bf16.msra.mxu0 %v1966
        %1992 = vmatprep.subr.bf16.mxu0 0
        %1993 = vmatpush1.bf16.msra.mxu0 %v1965
        %1994 = vmatprep.subr.bf16.mxu0 0
        %1995 = vmatpush1.bf16.msra.mxu0 %v1964
        %1996 = vmatprep.subr.bf16.mxu0 0
        %1997 = vmatpush2.bf16.msra.mxu0 0
        %1998 = vmatprep.subr.bf16.mxu0 0
        %1999 = vmatpush2.bf16.msra.mxu0 0
        %2000 = vmatprep.subr.bf16.mxu0 0
        %2001 = vmatpush2.bf16.msra.mxu0 0
        %2002 = vmatprep.subr.bf16.mxu0 0
        %2003 = vmatpush2.bf16.msra.mxu0 0
        %2004 = vmatprep.subr.bf16.mxu0 0
        %2005 = vmatpush2.bf16.msra.mxu0 0
        %2006 = vmatprep.subr.bf16.mxu0 0
        %2007 = vmatpush2.bf16.msra.mxu0 0
        %2008 = vmatprep.subr.bf16.mxu0 0
        %2009 = vmatpush2.bf16.msra.mxu0 0
        %2010 = vmatprep.subr.bf16.mxu0 0
        %2011 = vmatpush2.bf16.msra.mxu0 0
        %2012 = vmatprep.mubr.bf16.mxu0 0
        %2013 = vmatmul.mubr.bf16.gmra.mxu0 %v1915
        %v2014 = vpop.f32.mrf.mxu0
        %v2015 = vadd.f32 0.0, %v2014
        %v2016 = vpop.f32.mrf.mxu0
        %v2017 = vpop.f32.mrf.mxu0
        %v2018 = vpop.f32.mrf.mxu0
        %2019 = vdwg.mxu0
        %v2020 = vadd.f32 %v1914, %v2015
        %2021 = vst.msk [vmem:[#allocation2] sm:$0xff] %vm1810, %v2020
        %v2022 = vld [vmem:[#allocation2] sm:$0xff]
        %v2023 = vld [vmem:[%s12] sm:$0x1]
        %v2025 = vlaneseq
        %v2026 = vshrl.u32 %v2025, 7
        %v2027 = vsub.s32 0, %v2026
        %v2028 = vrot.slane %v2023, %v2027
        %v2030 = vadd.f32 %v2022, %v2028
        %2031 = vst.msk [vmem:[%s431] sm:$0xff] %vm1810, %v2030
        %s2032 = sand.u32 %s313, 1
        %s2033 = scalar_lea.sflag [#allocation4], %s2032
        %s2034 = sand.u32 %s313, 1
        %s2035 = smul.addr %s2034, 8
        %s2036 = scalar_lea.vmem [#allocation3], %s2035
        // Predicated region
        $region74: #{tpu_custom_call.1} parent=71 // pred_check
          %p2037 = pneg %p323
        $region75: #{tpu_custom_call.1} parent=71 // pred_check_branch
          %2039 = sbr.rel (%p2037) target = $region77
        $region76: #{tpu_custom_call.1} parent=71 // pred_region
          %s2041 = ssub.s32 128, 128
          %2042 = vsyncadd %s2033, %s2041
          %s2043 = smul.addr %s27, 128
          %s2044 = scalar_lea.hbm %s13, %s2043
          %s2046 = sshll.u32 %s2036, 4
          %s2047 = int_to_ptr.vmem [resolvable:$true] %s2046
          %2049 = dma.vmem_to_hbm [thread:$0]  %s2047, 128, %s2044, %s2033
        $region77: #{tpu_custom_call.1} parent=71 // pred_fallthru
          _
      $region72: #{tpu_custom_call.1} parent=5 // pred_fallthru
        _
      %p2050 = scmp.le.s32.totalorder 2, %s22
      // Predicated region
      $region78: #{tpu_custom_call.1} parent=5 // pred_check
        %p2051 = pneg %p2050
      $region79: #{tpu_custom_call.1} parent=5 // pred_check_branch
        %2053 = sbr.rel (%p2051) target = $region81
      $region80: #{tpu_custom_call.1} parent=5 // pred_region
        %s2054 = ssub.s32 %s22, 2
        // Predicated region
        $region82: #{tpu_custom_call.1} parent=80 // pred_check
          %p2055 = pneg %p329
        $region83: #{tpu_custom_call.1} parent=80 // pred_check_branch
          %2057 = sbr.rel (%p2055) target = $region85
        $region84: #{tpu_custom_call.1} parent=80 // pred_region
          %s2058 = sand.u32 %s314, 1
          %s2059 = scalar_lea.sflag [#allocation4], %s2058
          %s2060 = sand.u32 %s314, 1
          %s2061 = smul.addr %s2060, 8
          %s2062 = scalar_lea.vmem [#allocation3], %s2061
          %2063 = dma.done %s2059, 128
        $region85: #{tpu_custom_call.1} parent=80 // pred_fallthru
          _
      $region81: #{tpu_custom_call.1} parent=5 // pred_fallthru
        _
    $region6: #{tpu_custom_call.1} parent=1 // loop_footer
      %s26 = sadd.s32 1, %s22
    $region7: #{tpu_custom_call.1} parent=1 // loop_footer_branch
      %21 = sbr.rel target = $region3
    $region8: #{tpu_custom_call.1} parent=1 // loop_exit
      _
    %2064 = vsyncpa [#allocation4], 1
    %s2065 = scalar_lea.sflag [#allocation4], 1
    %2066 = vsyncpa %s2065, 1

</llo_original>
